<compile_context>
chip_gen: v7x
topology: tpu7x:2x2x1
jax: 0.10.0
libtpu: 0.0.40
codegen_flags: <defaults>
</compile_context>

<pallas_src>
import functools

import jax
import jax.numpy as jnp
from jax.experimental import pallas as pl
from jax.experimental.pallas import tpu as pltpu


def _softplus(x):
    # Matches torch.nn.Softplus(beta=1, threshold=20): linear above the threshold.
    return jnp.where(x > 20.0, x, jnp.log1p(jnp.exp(jnp.minimum(x, 20.0))))


def mlp_kernel(x_ref, w1_ref, b1_ref, w2_ref, b2_ref, w3_ref, b3_ref, o_ref):
    # x tile and weights arrive as bf16; all accumulation / bias / softplus in fp32.
    x = x_ref[...]
    b1 = b1_ref[...]  # biases read once (hoisted broadcasts)
    b2 = b2_ref[...]
    b3 = b3_ref[...]

    h1 = jnp.dot(x, w1_ref[...], preferred_element_type=jnp.float32) + b1
    h1 = _softplus(h1)                                            # fp32 elementwise
    h2 = jnp.dot(h1.astype(w2_ref.dtype), w2_ref[...],
                 preferred_element_type=jnp.float32) + b2
    h2 = _softplus(h2)
    o = jnp.dot(h2.astype(w3_ref.dtype), w3_ref[...],
                preferred_element_type=jnp.float32) + b3
    o_ref[...] = o.astype(o_ref.dtype)


@functools.partial(jax.jit, static_argnames=("block_b",))
def mlp_forward(x, w1, b1, w2, b2, w3, b3, *, block_b=128):
    """x: [B, num_genes] fp32; weights [in, out] fp32; biases [1, out] fp32.

    Returns fp32 [B, out_dim] matching Linear->Softplus->Linear->Softplus->Linear
    (matmuls in bf16 with fp32 accumulation).
    """
    B, num_genes = x.shape
    hidden1 = w1.shape[1]
    hidden2 = w2.shape[1]
    out_dim = w3.shape[1]

    # --- lane-dense output: pad the final layer to a multiple of 128 lanes ---
    n_out = max(128, pl.cdiv(out_dim, 128) * 128)
    w3p = jnp.zeros((hidden2, n_out), w3.dtype).at[:, :out_dim].set(w3)
    b3p = jnp.zeros((1, n_out), b3.dtype).at[:, :out_dim].set(b3)

    # --- bf16 operands for the MXU (fp32 accumulate inside the kernel) ---
    xb = x.astype(jnp.bfloat16)
    w1b = w1.astype(jnp.bfloat16)
    w2b = w2.astype(jnp.bfloat16)
    w3b = w3p.astype(jnp.bfloat16)

    # --- pad batch to a multiple of the batch tile ---
    grid_b = pl.cdiv(B, block_b)
    Bp = grid_b * block_b
    if Bp != B:
        xb = jnp.pad(xb, ((0, Bp - B), (0, 0)))

    def resident(shape):
        # Same block every grid step -> stays VMEM-resident (no per-step DMA).
        return pl.BlockSpec(shape, lambda i: (0, 0))

    out_padded = pl.pallas_call(
        mlp_kernel,
        out_shape=jax.ShapeDtypeStruct((Bp, n_out), jnp.float32),
        grid=(grid_b,),
        in_specs=[
            pl.BlockSpec((block_b, num_genes), lambda i: (i, 0)),  # x tile
            resident((num_genes, hidden1)),                        # w1
            resident((1, hidden1)),                                # b1 (fp32)
            resident((hidden1, hidden2)),                          # w2
            resident((1, hidden2)),                                # b2 (fp32)
            resident((hidden2, n_out)),                            # w3 (lane-padded)
            resident((1, n_out)),                                  # b3 (lane-padded)
        ],
        out_specs=pl.BlockSpec((block_b, n_out), lambda i: (i, 0)),
        compiler_params=pltpu.CompilerParams(
            dimension_semantics=("parallel",),  # lets v7x shard the batch grid over 2 TCs
        ),
    )(xb, w1b, b1, w2b, b2, w3b, b3p)

    return out_padded[:B, :out_dim]


def mlp_reference(x, w1, b1, w2, b2, w3, b3):
    """Pure-JAX reference with the same dtype policy as the kernel."""
    bf = jnp.bfloat16
    h1 = _softplus(jnp.dot(x.astype(bf), w1.astype(bf),
                           preferred_element_type=jnp.float32) + b1)
    h2 = _softplus(jnp.dot(h1.astype(bf), w2.astype(bf),
                           preferred_element_type=jnp.float32) + b2)
    return jnp.dot(h2.astype(bf), w3.astype(bf),
                   preferred_element_type=jnp.float32) + b3


def mlp_reference_fp32(x, w1, b1, w2, b2, w3, b3):
    """Full fp32 reference (matches the PyTorch module numerics)."""
    h1 = _softplus(x @ w1 + b1)
    h2 = _softplus(h1 @ w2 + b2)
    return h2 @ w3 + b3


if __name__ == "__main__":
    # Small, lane-aligned shapes consistent with MLP(num_genes, hidden1, hidden2) -> 2.
    B, num_genes, hidden1, hidden2, out_dim = 256, 128, 256, 128, 2

    key = jax.random.PRNGKey(0)
    kx, k1, k2, k3, kb1, kb2, kb3 = jax.random.split(key, 7)

    x = jax.random.normal(kx, (B, num_genes), dtype=jnp.float32)

    # Deterministic parameter init (PyTorch-like uniform bounds), stored as [in, out].
    def init_linear(kw, kb, fan_in, fan_out):
        bound = 1.0 / jnp.sqrt(fan_in)
        w = jax.random.uniform(kw, (fan_in, fan_out), jnp.float32, -bound, bound)
        b = jax.random.uniform(kb, (1, fan_out), jnp.float32, -bound, bound)
        return w, b

    w1, b1 = init_linear(k1, kb1, num_genes, hidden1)
    w2, b2 = init_linear(k2, kb2, hidden1, hidden2)
    w3, b3 = init_linear(k3, kb3, hidden2, out_dim)

    out = mlp_forward(x, w1, b1, w2, b2, w3, b3)
    out = jax.block_until_ready(out)
    assert out.shape == (B, out_dim)

    # Tight check vs. a reference using the same bf16-matmul / fp32-accumulate policy.
    ref = mlp_reference(x, w1, b1, w2, b2, w3, b3)
    assert jnp.allclose(out, ref, atol=2e-3, rtol=2e-3), "Pallas output mismatch (bf16 policy ref)"

    # Loose sanity check vs. the full-fp32 (PyTorch-equivalent) forward.
    ref32 = mlp_reference_fp32(x, w1, b1, w2, b2, w3, b3)
    assert jnp.allclose(out, ref32, atol=1e-1, rtol=1e-1), "Pallas output mismatch (fp32 ref)"

    print("KERNEL_OK")
</pallas_src>

<mosaic_0001>
module attributes {stable_mosaic.version = 11 : i64} {
  func.func @mlp_kernel(%arg0: i32, %arg1: memref<128x128xbf16, #tpu.memory_space<vmem>>, %arg2: memref<128x256xbf16, #tpu.memory_space<vmem>>, %arg3: memref<1x256xf32, #tpu.memory_space<vmem>>, %arg4: memref<256x128xbf16, #tpu.memory_space<vmem>>, %arg5: memref<1x128xf32, #tpu.memory_space<vmem>>, %arg6: memref<128x128xbf16, #tpu.memory_space<vmem>>, %arg7: memref<1x128xf32, #tpu.memory_space<vmem>>, %arg8: memref<128x128xf32, #tpu.memory_space<vmem>>) attributes {dimension_semantics = [#tpu.dimension_semantics<parallel>], iteration_bounds = array<i64: 2>, scalar_prefetch = 0 : i64, scratch_operands = 0 : i64, tpu.core_type = #tpu.core_type<tc>, window_params = [{transform_indices = @transform_0, window_bounds = array<i64: 128, 128>}, {pipeline_mode = #tpu.pipeline_mode<synchronous>, transform_indices = @transform_1, window_bounds = array<i64: 128, 256>}, {pipeline_mode = #tpu.pipeline_mode<synchronous>, transform_indices = @transform_2, window_bounds = array<i64: 1, 256>}, {pipeline_mode = #tpu.pipeline_mode<synchronous>, transform_indices = @transform_3, window_bounds = array<i64: 256, 128>}, {pipeline_mode = #tpu.pipeline_mode<synchronous>, transform_indices = @transform_4, window_bounds = array<i64: 1, 128>}, {pipeline_mode = #tpu.pipeline_mode<synchronous>, transform_indices = @transform_5, window_bounds = array<i64: 128, 128>}, {pipeline_mode = #tpu.pipeline_mode<synchronous>, transform_indices = @transform_6, window_bounds = array<i64: 1, 128>}, {transform_indices = @transform_7, window_bounds = array<i64: 128, 128>}]} {
    %c0 = arith.constant 0 : index
    %c0_0 = arith.constant 0 : index
    %0 = vector.load %arg1[%c0, %c0_0] : memref<128x128xbf16, #tpu.memory_space<vmem>>, vector<128x128xbf16>
    %c0_1 = arith.constant 0 : index
    %c0_2 = arith.constant 0 : index
    %1 = vector.load %arg3[%c0_1, %c0_2] : memref<1x256xf32, #tpu.memory_space<vmem>>, vector<1x256xf32>
    %c0_3 = arith.constant 0 : index
    %c0_4 = arith.constant 0 : index
    %2 = vector.load %arg5[%c0_3, %c0_4] : memref<1x128xf32, #tpu.memory_space<vmem>>, vector<1x128xf32>
    %c0_5 = arith.constant 0 : index
    %c0_6 = arith.constant 0 : index
    %3 = vector.load %arg7[%c0_5, %c0_6] : memref<1x128xf32, #tpu.memory_space<vmem>>, vector<1x128xf32>
    %c0_7 = arith.constant 0 : index
    %c0_8 = arith.constant 0 : index
    %4 = vector.load %arg2[%c0_7, %c0_8] : memref<128x256xbf16, #tpu.memory_space<vmem>>, vector<128x256xbf16>
    %cst = arith.constant dense<0.000000e+00> : vector<128x256xf32>
    %5 = tpu.matmul %0, %4, %cst {dimension_numbers = #tpu.dot_dimension_numbers<[1], [0], [0], [1], [0, 0, 1, 1], [], []>} : vector<128x128xbf16>, vector<128x256xbf16>, vector<128x256xf32> -> vector<128x256xf32>
    %6 = vector.broadcast %1 : vector<1x256xf32> to vector<128x256xf32>
    %7 = arith.addf %5, %6 : vector<128x256xf32>
    %cst_9 = arith.constant 2.000000e+01 : f32
    %8 = vector.broadcast %cst_9 : f32 to vector<128x256xf32>
    %9 = arith.cmpf ogt, %7, %8 : vector<128x256xf32>
    %cst_10 = arith.constant 2.000000e+01 : f32
    %10 = vector.broadcast %cst_10 : f32 to vector<128x256xf32>
    %11 = arith.minimumf %7, %10 : vector<128x256xf32>
    %12 = math.exp %11 : vector<128x256xf32>
    %13 = math.log1p %12 : vector<128x256xf32>
    %14 = arith.select %9, %7, %13 : vector<128x256xi1>, vector<128x256xf32>
    %15 = arith.truncf %14 : vector<128x256xf32> to vector<128x256xbf16>
    %c0_11 = arith.constant 0 : index
    %c0_12 = arith.constant 0 : index
    %16 = vector.load %arg4[%c0_11, %c0_12] : memref<256x128xbf16, #tpu.memory_space<vmem>>, vector<256x128xbf16>
    %cst_13 = arith.constant dense<0.000000e+00> : vector<128x128xf32>
    %17 = tpu.matmul %15, %16, %cst_13 {dimension_numbers = #tpu.dot_dimension_numbers<[1], [0], [0], [1], [0, 0, 1, 1], [], []>} : vector<128x256xbf16>, vector<256x128xbf16>, vector<128x128xf32> -> vector<128x128xf32>
    %18 = vector.broadcast %2 : vector<1x128xf32> to vector<128x128xf32>
    %19 = arith.addf %17, %18 : vector<128x128xf32>
    %cst_14 = arith.constant 2.000000e+01 : f32
    %20 = vector.broadcast %cst_14 : f32 to vector<128x128xf32>
    %21 = arith.cmpf ogt, %19, %20 : vector<128x128xf32>
    %cst_15 = arith.constant 2.000000e+01 : f32
    %22 = vector.broadcast %cst_15 : f32 to vector<128x128xf32>
    %23 = arith.minimumf %19, %22 : vector<128x128xf32>
    %24 = math.exp %23 : vector<128x128xf32>
    %25 = math.log1p %24 : vector<128x128xf32>
    %26 = arith.select %21, %19, %25 : vector<128x128xi1>, vector<128x128xf32>
    %27 = arith.truncf %26 : vector<128x128xf32> to vector<128x128xbf16>
    %c0_16 = arith.constant 0 : index
    %c0_17 = arith.constant 0 : index
    %28 = vector.load %arg6[%c0_16, %c0_17] : memref<128x128xbf16, #tpu.memory_space<vmem>>, vector<128x128xbf16>
    %cst_18 = arith.constant dense<0.000000e+00> : vector<128x128xf32>
    %29 = tpu.matmul %27, %28, %cst_18 {dimension_numbers = #tpu.dot_dimension_numbers<[1], [0], [0], [1], [0, 0, 1, 1], [], []>} : vector<128x128xbf16>, vector<128x128xbf16>, vector<128x128xf32> -> vector<128x128xf32>
    %30 = vector.broadcast %3 : vector<1x128xf32> to vector<128x128xf32>
    %31 = arith.addf %29, %30 : vector<128x128xf32>
    %c0_19 = arith.constant 0 : index
    %c0_20 = arith.constant 0 : index
    %32 = vector.load %arg8[%c0_19, %c0_20] : memref<128x128xf32, #tpu.memory_space<vmem>>, vector<128x128xf32>
    tpu.vector_store %arg8[%c0_19, %c0_20], %31 {strides = array<i32>} : memref<128x128xf32, #tpu.memory_space<vmem>>, vector<128x128xf32>,
    return
  }
  func.func @transform_0(%arg0: i32) -> (i32, i32) {
    %c0_i32 = arith.constant 0 : i32
    %c0_i32_0 = arith.constant 0 : i32
    return %arg0, %c0_i32 : i32, i32
  }
  func.func @transform_1(%arg0: i32) -> (i32, i32) {
    %c0_i32 = arith.constant 0 : i32
    %c0_i32_0 = arith.constant 0 : i32
    %c0_i32_1 = arith.constant 0 : i32
    return %c0_i32, %c0_i32_0 : i32, i32
  }
  func.func @transform_2(%arg0: i32) -> (i32, i32) {
    %c0_i32 = arith.constant 0 : i32
    %c0_i32_0 = arith.constant 0 : i32
    %c0_i32_1 = arith.constant 0 : i32
    return %c0_i32, %c0_i32_0 : i32, i32
  }
  func.func @transform_3(%arg0: i32) -> (i32, i32) {
    %c0_i32 = arith.constant 0 : i32
    %c0_i32_0 = arith.constant 0 : i32
    %c0_i32_1 = arith.constant 0 : i32
    return %c0_i32, %c0_i32_0 : i32, i32
  }
  func.func @transform_4(%arg0: i32) -> (i32, i32) {
    %c0_i32 = arith.constant 0 : i32
    %c0_i32_0 = arith.constant 0 : i32
    %c0_i32_1 = arith.constant 0 : i32
    return %c0_i32, %c0_i32_0 : i32, i32
  }
  func.func @transform_5(%arg0: i32) -> (i32, i32) {
    %c0_i32 = arith.constant 0 : i32
    %c0_i32_0 = arith.constant 0 : i32
    %c0_i32_1 = arith.constant 0 : i32
    return %c0_i32, %c0_i32_0 : i32, i32
  }
  func.func @transform_6(%arg0: i32) -> (i32, i32) {
    %c0_i32 = arith.constant 0 : i32
    %c0_i32_0 = arith.constant 0 : i32
    %c0_i32_1 = arith.constant 0 : i32
    return %c0_i32, %c0_i32_0 : i32, i32
  }
  func.func @transform_7(%arg0: i32) -> (i32, i32) {
    %c0_i32 = arith.constant 0 : i32
    %c0_i32_0 = arith.constant 0 : i32
    return %arg0, %c0_i32 : i32, i32
  }
}

</mosaic_0001>

<llo_original>
// kernel: mlp_forward.1
$region0: #{mlp_forward.1}
  #allocation0 [shape = 'u32[]', space=smem, size = 0x4, offset = 0x4, fixed_abs, tag = 'smem constant byte address 0x4 - core index']
  #allocation1 [shape = 'u32[144,128]{1,0:T(1,128)}', space=vmem, size = 0x12000, scoped, tag = 'internal scratch']
  %s0 = inlined_call_operand.vmem [shape: bf16[256,128], index: 0, kind: input, shape index: {}]
  %s1 = inlined_call_operand.vmem [shape: bf16[128,256], index: 1, kind: input, shape index: {}]
  %s2 = inlined_call_operand.vmem [shape: f32[1,256], index: 2, kind: input, shape index: {}]
  %s3 = inlined_call_operand.vmem [shape: bf16[256,128], index: 3, kind: input, shape index: {}]
  %s4 = inlined_call_operand.vmem [shape: f32[1,128], index: 4, kind: input, shape index: {}]
  %s5 = inlined_call_operand.vmem [shape: bf16[128,128], index: 5, kind: input, shape index: {}]
  %s6 = inlined_call_operand.vmem [shape: f32[1,128], index: 6, kind: input, shape index: {}]
  %s7 = inlined_call_operand.vmem [shape: f32[256,128], index: 7, kind: output, shape index: {}]
  %s8 = sld [smem:[#allocation0]]
  $region61: #{mlp_forward.1} parent=0
    _
  %s10 = ssub.s32 1, %s8
  %s11 = scalar_select 0, %s10, %s8
  loop: start=0, step=1, limit=4
  $region2: #{mlp_forward.1} parent=0 // loop_pre_header
    _
  $region3: #{mlp_forward.1} parent=0 // loop_header
    %s13 = sphi 0, %s17
    %p14 = scmp.ge.s32.totalorder %s13, 4
    %s23 = sphi 0, %s25
    %s26 = sphi 0, %s23
    %s27 = sphi 0, %s26
    %s43 = sphi 0, %s27
    %s47 = sphi 0, %s47
    %s49 = sphi 0, %s47
    %s50 = sphi 0, %s49
    %s64 = sphi 0, %s50
    %s68 = sphi 0, %s68
    %s70 = sphi 0, %s68
    %s71 = sphi 0, %s70
    %s85 = sphi 0, %s71
    %s89 = sphi 0, %s89
    %s91 = sphi 0, %s89
    %s92 = sphi 0, %s91
    %s106 = sphi 0, %s92
    %s110 = sphi 0, %s110
    %s112 = sphi 0, %s110
    %s113 = sphi 0, %s112
    %s127 = sphi 0, %s113
    %s131 = sphi 0, %s131
    %s133 = sphi 0, %s131
    %s134 = sphi 0, %s133
    %s148 = sphi 0, %s134
    %s152 = sphi 0, %s152
    %s154 = sphi 0, %s152
    %s155 = sphi 0, %s154
    %s169 = sphi 0, %s155
    %s175 = sphi 0, %s177
    %s178 = sphi 0, %s175
    %s179 = sphi 0, %s178
    %s195 = sphi 0, %s179
  $region4: #{mlp_forward.1} parent=0 // loop_header_branch
    %16 = sbr.rel (%p14) target = $region8
  $region5: #{mlp_forward.1} parent=0 // loop_body
    %s18 = ssub.s32 %s13, 1
    %s19 = ssub.s32 %s13, 2
    %s20 = sadd.s32 %s13, 1
    %s21 = ssub.s32 %s13, %s20
    %p22 = scmp.eq.s32.totalorder %s21, 0
    %s24 = sadd.s32 %s23, 1
    %s25 = scalar_select %p22, %s23, %s24
    %p28 = pneg %p22
    %p29 = scmp.eq.s32.totalorder %s13, 1
    %p30 = por %p28, %p29
    %p31 = scmp.ne.s32.totalorder %s23, %s26
    %p32 = scmp.eq.s32.totalorder %s13, 0
    %p33 = por %p31, %p32
    %p34 = scmp.ne.s32.totalorder %s23, %s26
    %p35 = scmp.eq.s32.totalorder %s18, 1
    %p36 = por %p34, %p35
    %p37 = scmp.ne.s32.totalorder %s26, %s27
    %p38 = scmp.eq.s32.totalorder %s18, 0
    %p39 = por %p37, %p38
    %p40 = scmp.ne.s32.totalorder %s26, %s27
    %p41 = scmp.eq.s32.totalorder %s19, 1
    %p42 = por %p40, %p41
    %p44 = scmp.ne.s32.totalorder %s27, %s43
    %p45 = scmp.eq.s32.totalorder %s19, 0
    %p46 = por %p44, %p45
    %s48 = sadd.s32 %s47, 1
    %p51 = scmp.eq.s32.totalorder %s13, 1
    %p52 = scmp.ne.s32.totalorder %s47, %s49
    %p53 = scmp.eq.s32.totalorder %s13, 0
    %p54 = por %p52, %p53
    %p55 = scmp.ne.s32.totalorder %s47, %s49
    %p56 = scmp.eq.s32.totalorder %s18, 1
    %p57 = por %p55, %p56
    %p58 = scmp.ne.s32.totalorder %s49, %s50
    %p59 = scmp.eq.s32.totalorder %s18, 0
    %p60 = por %p58, %p59
    %p61 = scmp.ne.s32.totalorder %s49, %s50
    %p62 = scmp.eq.s32.totalorder %s19, 1
    %p63 = por %p61, %p62
    %p65 = scmp.ne.s32.totalorder %s50, %s64
    %p66 = scmp.eq.s32.totalorder %s19, 0
    %p67 = por %p65, %p66
    %s69 = sadd.s32 %s68, 1
    %p72 = scmp.eq.s32.totalorder %s13, 1
    %p73 = scmp.ne.s32.totalorder %s68, %s70
    %p74 = scmp.eq.s32.totalorder %s13, 0
    %p75 = por %p73, %p74
    %p76 = scmp.ne.s32.totalorder %s68, %s70
    %p77 = scmp.eq.s32.totalorder %s18, 1
    %p78 = por %p76, %p77
    %p79 = scmp.ne.s32.totalorder %s70, %s71
    %p80 = scmp.eq.s32.totalorder %s18, 0
    %p81 = por %p79, %p80
    %p82 = scmp.ne.s32.totalorder %s70, %s71
    %p83 = scmp.eq.s32.totalorder %s19, 1
    %p84 = por %p82, %p83
    %p86 = scmp.ne.s32.totalorder %s71, %s85
    %p87 = scmp.eq.s32.totalorder %s19, 0
    %p88 = por %p86, %p87
    %s90 = sadd.s32 %s89, 1
    %p93 = scmp.eq.s32.totalorder %s13, 1
    %p94 = scmp.ne.s32.totalorder %s89, %s91
    %p95 = scmp.eq.s32.totalorder %s13, 0
    %p96 = por %p94, %p95
    %p97 = scmp.ne.s32.totalorder %s89, %s91
    %p98 = scmp.eq.s32.totalorder %s18, 1
    %p99 = por %p97, %p98
    %p100 = scmp.ne.s32.totalorder %s91, %s92
    %p101 = scmp.eq.s32.totalorder %s18, 0
    %p102 = por %p100, %p101
    %p103 = scmp.ne.s32.totalorder %s91, %s92
    %p104 = scmp.eq.s32.totalorder %s19, 1
    %p105 = por %p103, %p104
    %p107 = scmp.ne.s32.totalorder %s92, %s106
    %p108 = scmp.eq.s32.totalorder %s19, 0
    %p109 = por %p107, %p108
    %s111 = sadd.s32 %s110, 1
    %p114 = scmp.eq.s32.totalorder %s13, 1
    %p115 = scmp.ne.s32.totalorder %s110, %s112
    %p116 = scmp.eq.s32.totalorder %s13, 0
    %p117 = por %p115, %p116
    %p118 = scmp.ne.s32.totalorder %s110, %s112
    %p119 = scmp.eq.s32.totalorder %s18, 1
    %p120 = por %p118, %p119
    %p121 = scmp.ne.s32.totalorder %s112, %s113
    %p122 = scmp.eq.s32.totalorder %s18, 0
    %p123 = por %p121, %p122
    %p124 = scmp.ne.s32.totalorder %s112, %s113
    %p125 = scmp.eq.s32.totalorder %s19, 1
    %p126 = por %p124, %p125
    %p128 = scmp.ne.s32.totalorder %s113, %s127
    %p129 = scmp.eq.s32.totalorder %s19, 0
    %p130 = por %p128, %p129
    %s132 = sadd.s32 %s131, 1
    %p135 = scmp.eq.s32.totalorder %s13, 1
    %p136 = scmp.ne.s32.totalorder %s131, %s133
    %p137 = scmp.eq.s32.totalorder %s13, 0
    %p138 = por %p136, %p137
    %p139 = scmp.ne.s32.totalorder %s131, %s133
    %p140 = scmp.eq.s32.totalorder %s18, 1
    %p141 = por %p139, %p140
    %p142 = scmp.ne.s32.totalorder %s133, %s134
    %p143 = scmp.eq.s32.totalorder %s18, 0
    %p144 = por %p142, %p143
    %p145 = scmp.ne.s32.totalorder %s133, %s134
    %p146 = scmp.eq.s32.totalorder %s19, 1
    %p147 = por %p145, %p146
    %p149 = scmp.ne.s32.totalorder %s134, %s148
    %p150 = scmp.eq.s32.totalorder %s19, 0
    %p151 = por %p149, %p150
    %s153 = sadd.s32 %s152, 1
    %p156 = scmp.eq.s32.totalorder %s13, 1
    %p157 = scmp.ne.s32.totalorder %s152, %s154
    %p158 = scmp.eq.s32.totalorder %s13, 0
    %p159 = por %p157, %p158
    %p160 = scmp.ne.s32.totalorder %s152, %s154
    %p161 = scmp.eq.s32.totalorder %s18, 1
    %p162 = por %p160, %p161
    %p163 = scmp.ne.s32.totalorder %s154, %s155
    %p164 = scmp.eq.s32.totalorder %s18, 0
    %p165 = por %p163, %p164
    %p166 = scmp.ne.s32.totalorder %s154, %s155
    %p167 = scmp.eq.s32.totalorder %s19, 1
    %p168 = por %p166, %p167
    %p170 = scmp.ne.s32.totalorder %s155, %s169
    %p171 = scmp.eq.s32.totalorder %s19, 0
    %p172 = por %p170, %p171
    %s173 = ssub.s32 %s13, %s20
    %p174 = scmp.eq.s32.totalorder %s173, 0
    %s176 = sadd.s32 %s175, 1
    %s177 = scalar_select %p174, %s175, %s176
    %p180 = pneg %p174
    %p181 = scmp.eq.s32.totalorder %s13, 1
    %p182 = por %p180, %p181
    %p183 = scmp.ne.s32.totalorder %s175, %s178
    %p184 = scmp.eq.s32.totalorder %s13, 0
    %p185 = por %p183, %p184
    %p186 = scmp.ne.s32.totalorder %s175, %s178
    %p187 = scmp.eq.s32.totalorder %s18, 1
    %p188 = por %p186, %p187
    %p189 = scmp.ne.s32.totalorder %s178, %s179
    %p190 = scmp.eq.s32.totalorder %s18, 0
    %p191 = por %p189, %p190
    %p192 = scmp.ne.s32.totalorder %s178, %s179
    %p193 = scmp.eq.s32.totalorder %s19, 1
    %p194 = por %p192, %p193
    %p196 = scmp.ne.s32.totalorder %s179, %s195
    %p197 = scmp.eq.s32.totalorder %s19, 0
    %p198 = por %p196, %p197
    %p199 = scmp.le.s32.totalorder 1, %s13
    %p200 = scmp.lt.s32.totalorder %s13, 3
    %p201 = pnand %p199, %p200
    %p202 = pneg %p201
    // Predicated region
    $region9: #{mlp_forward.1} parent=5 // pred_check
      _
    $region10: #{mlp_forward.1} parent=5 // pred_check_branch
      %204 = sbr.rel (%p201) target = $region12
    $region11: #{mlp_forward.1} parent=5 // pred_region
      %s205 = ssub.s32 %s13, 1
      // Predicated region
      $region13: #{mlp_forward.1} parent=11 // pred_check
        %p206 = pneg %p60
      $region14: #{mlp_forward.1} parent=11 // pred_check_branch
        %208 = sbr.rel (%p206) target = $region16
      $region15: #{mlp_forward.1} parent=11 // pred_region
        _
      $region16: #{mlp_forward.1} parent=11 // pred_fallthru
        _
      // Predicated region
      $region17: #{mlp_forward.1} parent=11 // pred_check
        %p209 = pneg %p81
      $region18: #{mlp_forward.1} parent=11 // pred_check_branch
        %211 = sbr.rel (%p209) target = $region20
      $region19: #{mlp_forward.1} parent=11 // pred_region
        _
      $region20: #{mlp_forward.1} parent=11 // pred_fallthru
        _
      // Predicated region
      $region21: #{mlp_forward.1} parent=11 // pred_check
        %p212 = pneg %p102
      $region22: #{mlp_forward.1} parent=11 // pred_check_branch
        %214 = sbr.rel (%p212) target = $region24
      $region23: #{mlp_forward.1} parent=11 // pred_region
        _
      $region24: #{mlp_forward.1} parent=11 // pred_fallthru
        _
      // Predicated region
      $region25: #{mlp_forward.1} parent=11 // pred_check
        %p215 = pneg %p123
      $region26: #{mlp_forward.1} parent=11 // pred_check_branch
        %217 = sbr.rel (%p215) target = $region28
      $region27: #{mlp_forward.1} parent=11 // pred_region
        _
      $region28: #{mlp_forward.1} parent=11 // pred_fallthru
        _
      // Predicated region
      $region29: #{mlp_forward.1} parent=11 // pred_check
        %p218 = pneg %p144
      $region30: #{mlp_forward.1} parent=11 // pred_check_branch
        %220 = sbr.rel (%p218) target = $region32
      $region31: #{mlp_forward.1} parent=11 // pred_region
        _
      $region32: #{mlp_forward.1} parent=11 // pred_fallthru
        _
      // Predicated region
      $region33: #{mlp_forward.1} parent=11 // pred_check
        %p221 = pneg %p165
      $region34: #{mlp_forward.1} parent=11 // pred_check_branch
        %223 = sbr.rel (%p221) target = $region36
      $region35: #{mlp_forward.1} parent=11 // pred_region
        _
      $region36: #{mlp_forward.1} parent=11 // pred_fallthru
        _
    $region12: #{mlp_forward.1} parent=5 // pred_fallthru
      _
    %p224 = scmp.lt.s32.totalorder %s13, 2
    // Predicated region
    $region37: #{mlp_forward.1} parent=5 // pred_check
      %p225 = pneg %p224
    $region38: #{mlp_forward.1} parent=5 // pred_check_branch
      %227 = sbr.rel (%p225) target = $region40
    $region39: #{mlp_forward.1} parent=5 // pred_region
      // Predicated region
      $region41: #{mlp_forward.1} parent=39 // pred_check
        %p228 = pneg %p33
      $region42: #{mlp_forward.1} parent=39 // pred_check_branch
        %230 = sbr.rel (%p228) target = $region44
      $region43: #{mlp_forward.1} parent=39 // pred_region
        %s231 = smul.u32 16, %s13
        %p232 = scmp.lt.s32.totalorder %s231, 31
        %s233 = scalar_select %p232, %s231, 31
        %s234 = smul.addr %s233, 4
        %s235 = scalar_lea.vmem %s0, %s234
        %s236 = smul.u32 16, %s13
      $region44: #{mlp_forward.1} parent=39 // pred_fallthru
        _
    $region40: #{mlp_forward.1} parent=5 // pred_fallthru
      _
    %p237 = scmp.le.s32.totalorder 1, %s13
    %p238 = scmp.lt.s32.totalorder %s13, 3
    %p239 = pnand %p237, %p238
    %p240 = pneg %p239
    // Predicated region
    $region45: #{mlp_forward.1} parent=5 // pred_check
      _
    $region46: #{mlp_forward.1} parent=5 // pred_check_branch
      %242 = sbr.rel (%p239) target = $region48
    $region47: #{mlp_forward.1} parent=5 // pred_region
      %s243 = ssub.s32 %s13, 1
      %s244 = smul.u32 16, %s18
      %p245 = scmp.lt.s32.totalorder %s244, 31
      %s246 = scalar_select %p245, %s244, 31
      %s247 = smul.addr %s246, 4
      %s248 = scalar_lea.vmem %s0, %s247
      %p249 = pneg %p39
      %p250 = pneg %p36
      %p251 = pneg %p60
      %p252 = pneg %p57
      %p253 = pneg %p81
      %p254 = pneg %p78
      %p255 = pneg %p102
      %p256 = pneg %p99
      %p257 = pneg %p123
      %p258 = pneg %p120
      %p259 = pneg %p144
      %p260 = pneg %p141
      %p261 = pneg %p165
      %p262 = pneg %p162
      %p263 = pneg %p191
      %p264 = pneg %p188
      %s265 = smul.u32 16, %s18
      %p266 = scmp.lt.s32.totalorder %s265, 31
      %s267 = scalar_select %p266, %s265, 31
      %s268 = smul.addr %s267, 8
      %s269 = scalar_lea.vmem %s7, %s268
      %s270 = smul.u32 16, %s18
      %p271 = scmp.lt.s32.totalorder %s270, 31
      %s272 = scalar_select %p271, %s270, 31
      %s273 = smul.addr %s272, 4
      %s274 = scalar_lea.vmem %s0, %s273
      %s275 = smul.u32 16, %s18
      %s276 = smul.u32 16, %s18
      %p277 = scmp.lt.s32.totalorder %s276, 31
      %s278 = scalar_select %p277, %s276, 31
      %s279 = smul.addr %s278, 8
      %s280 = scalar_lea.vmem %s7, %s279
      %s281 = smul.u32 16, %s18
      %v283 = vld [vmem:[%s274] sm:$0xf]
      %v284 = vld [vmem:[%s274 + $0x4] sm:$0xf]
      %v285 = vld [vmem:[%s274 + $0x8] sm:$0xf]
      %v286 = vld [vmem:[%s274 + $0xc] sm:$0xf]
      %v287 = vld [vmem:[%s274 + $0x10] sm:$0xf]
      %v288 = vld [vmem:[%s274 + $0x14] sm:$0xf]
      %v289 = vld [vmem:[%s274 + $0x18] sm:$0xf]
      %v290 = vld [vmem:[%s274 + $0x1c] sm:$0xf]
      %v291 = vld [vmem:[%s274 + $0x20] sm:$0xf]
      %v292 = vld [vmem:[%s274 + $0x24] sm:$0xf]
      %v293 = vld [vmem:[%s274 + $0x28] sm:$0xf]
      %v294 = vld [vmem:[%s274 + $0x2c] sm:$0xf]
      %v295 = vld [vmem:[%s274 + $0x30] sm:$0xf]
      %v296 = vld [vmem:[%s274 + $0x34] sm:$0xf]
      %v297 = vld [vmem:[%s274 + $0x38] sm:$0xf]
      %v298 = vld [vmem:[%s274 + $0x3c] sm:$0xf]
      %v299 = vld [vmem:[%s2] sm:$0x3]
      %v300 = vld [vmem:[%s4] sm:$0x1]
      %v301 = vld [vmem:[%s6] sm:$0x1]
      %v302 = vld [vmem:[%s1] sm:$0xff]
      %v303 = vld [vmem:[%s1 + $0x8] sm:$0xff]
      %v304 = vld [vmem:[%s1 + $0x10] sm:$0xff]
      %v305 = vld [vmem:[%s1 + $0x18] sm:$0xff]
      %v306 = vld [vmem:[%s1 + $0x20] sm:$0xff]
      %v307 = vld [vmem:[%s1 + $0x28] sm:$0xff]
      %v308 = vld [vmem:[%s1 + $0x30] sm:$0xff]
      %v309 = vld [vmem:[%s1 + $0x38] sm:$0xff]
      %v310 = vld [vmem:[%s1 + $0x40] sm:$0xff]
      %v311 = vld [vmem:[%s1 + $0x48] sm:$0xff]
      %v312 = vld [vmem:[%s1 + $0x50] sm:$0xff]
      %v313 = vld [vmem:[%s1 + $0x58] sm:$0xff]
      %v314 = vld [vmem:[%s1 + $0x60] sm:$0xff]
      %v315 = vld [vmem:[%s1 + $0x68] sm:$0xff]
      %v316 = vld [vmem:[%s1 + $0x70] sm:$0xff]
      %v317 = vld [vmem:[%s1 + $0x78] sm:$0xff]
      %v319 = vlaneseq
      %v320 = vshrl.u32 %v319, 7
      %v321 = vsub.s32 0, %v320
      %v322 = vrot.slane %v299, %v321
      %v323 = vlaneseq
      %v324 = vshrl.u32 %v323, 7
      %v325 = vsub.s32 1, %v324
      %v326 = vrot.slane %v299, %v325
      %v345 = vunpack.c.l.b16 %v283
      %v346 = vunpack.c.l.b16 %v284
      %v347 = vunpack.c.l.b16 %v285
      %v348 = vunpack.c.l.b16 %v286
      %v349 = vunpack.c.l.b16 %v287
      %v350 = vunpack.c.l.b16 %v288
      %v351 = vunpack.c.l.b16 %v289
      %v352 = vunpack.c.l.b16 %v290
      %v353 = vunpack.c.l.b16 %v291
      %v354 = vunpack.c.l.b16 %v292
      %v355 = vunpack.c.l.b16 %v293
      %v356 = vunpack.c.l.b16 %v294
      %v357 = vunpack.c.l.b16 %v295
      %v358 = vunpack.c.l.b16 %v296
      %v359 = vunpack.c.l.b16 %v297
      %v360 = vunpack.c.l.b16 %v298
      %v361 = vpack.c.b16 %v346, %v345
      %v362 = vpack.c.b16 %v348, %v347
      %v363 = vpack.c.b16 %v350, %v349
      %v364 = vpack.c.b16 %v352, %v351
      %v365 = vpack.c.b16 %v354, %v353
      %v366 = vpack.c.b16 %v356, %v355
      %v367 = vpack.c.b16 %v358, %v357
      %v368 = vpack.c.b16 %v360, %v359
      %v393 = vunpack.c.l.b16 %v302
      %v394 = vunpack.c.h.b16 %v302
      %v395 = vunpack.c.l.b16 %v303
      %v396 = vunpack.c.h.b16 %v303
      %v397 = vunpack.c.l.b16 %v304
      %v398 = vunpack.c.h.b16 %v304
      %v399 = vunpack.c.l.b16 %v305
      %v400 = vunpack.c.h.b16 %v305
      %v401 = vunpack.c.l.b16 %v306
      %v402 = vunpack.c.h.b16 %v306
      %v403 = vunpack.c.l.b16 %v307
      %v404 = vunpack.c.h.b16 %v307
      %v405 = vunpack.c.l.b16 %v308
      %v406 = vunpack.c.h.b16 %v308
      %v407 = vunpack.c.l.b16 %v309
      %v408 = vunpack.c.h.b16 %v309
      %v409 = vunpack.c.l.b16 %v310
      %v410 = vunpack.c.h.b16 %v310
      %v411 = vunpack.c.l.b16 %v311
      %v412 = vunpack.c.h.b16 %v311
      %v413 = vunpack.c.l.b16 %v312
      %v414 = vunpack.c.h.b16 %v312
      %v415 = vunpack.c.l.b16 %v313
      %v416 = vunpack.c.h.b16 %v313
      %v417 = vunpack.c.l.b16 %v314
      %v418 = vunpack.c.h.b16 %v314
      %v419 = vunpack.c.l.b16 %v315
      %v420 = vunpack.c.h.b16 %v315
      %v421 = vunpack.c.l.b16 %v316
      %v422 = vunpack.c.h.b16 %v316
      %v423 = vunpack.c.l.b16 %v317
      %v424 = vunpack.c.h.b16 %v317
      %v425 = vpack.c.b16 %v395, %v393
      %v426 = vpack.c.b16 %v396, %v394
      %v427 = vpack.c.b16 %v399, %v397
      %v428 = vpack.c.b16 %v400, %v398
      %v429 = vpack.c.b16 %v403, %v401
      %v430 = vpack.c.b16 %v404, %v402
      %v431 = vpack.c.b16 %v407, %v405
      %v432 = vpack.c.b16 %v408, %v406
      %v433 = vpack.c.b16 %v411, %v409
      %v434 = vpack.c.b16 %v412, %v410
      %v435 = vpack.c.b16 %v415, %v413
      %v436 = vpack.c.b16 %v416, %v414
      %v437 = vpack.c.b16 %v419, %v417
      %v438 = vpack.c.b16 %v420, %v418
      %v439 = vpack.c.b16 %v423, %v421
      %v440 = vpack.c.b16 %v424, %v422
      %457 = vmatprep.subr.bf16.mxu0 %v426
      %458 = vmatpush1.bf16.msra.mxu0 %v425
      %459 = vmatprep.subr.bf16.mxu0 %v428
      %460 = vmatpush1.bf16.msra.mxu0 %v427
      %461 = vmatprep.subr.bf16.mxu0 %v430
      %462 = vmatpush1.bf16.msra.mxu0 %v429
      %463 = vmatprep.subr.bf16.mxu0 %v432
      %464 = vmatpush1.bf16.msra.mxu0 %v431
      %465 = vmatprep.subr.bf16.mxu0 %v434
      %466 = vmatpush1.bf16.msra.mxu0 %v433
      %467 = vmatprep.subr.bf16.mxu0 %v436
      %468 = vmatpush1.bf16.msra.mxu0 %v435
      %469 = vmatprep.subr.bf16.mxu0 %v438
      %470 = vmatpush1.bf16.msra.mxu0 %v437
      %471 = vmatprep.subr.bf16.mxu0 %v440
      %472 = vmatpush1.bf16.msra.mxu0 %v439
      %473 = vmatprep.subr.bf16.mxu0 0
      %474 = vmatpush1.bf16.msra.mxu0 0
      %475 = vmatprep.subr.bf16.mxu0 0
      %476 = vmatpush1.bf16.msra.mxu0 0
      %477 = vmatprep.subr.bf16.mxu0 0
      %478 = vmatpush1.bf16.msra.mxu0 0
      %479 = vmatprep.subr.bf16.mxu0 0
      %480 = vmatpush1.bf16.msra.mxu0 0
      %481 = vmatprep.subr.bf16.mxu0 0
      %482 = vmatpush1.bf16.msra.mxu0 0
      %483 = vmatprep.subr.bf16.mxu0 0
      %484 = vmatpush1.bf16.msra.mxu0 0
      %485 = vmatprep.subr.bf16.mxu0 0
      %486 = vmatpush1.bf16.msra.mxu0 0
      %487 = vmatprep.subr.bf16.mxu0 0
      %488 = vmatpush1.bf16.msra.mxu0 0
      %489 = vmatprep.mubr.bf16.mxu0 0
      %490 = vmatmul.mubr.bf16.gmra.mrb[0].mxu0 %v361
      %v491 = vpop.f32.mrb[0].mxu0
      %v492 = vadd.f32 %v322, %v491
      %v493 = vpop.f32.mrb[0].mxu0
      %v494 = vadd.f32 %v326, %v493
      %v495 = vpop.f32.mrb[0].mxu0
      %v496 = vadd.f32 %v322, %v495
      %v497 = vpop.f32.mrb[0].mxu0
      %v498 = vadd.f32 %v326, %v497
      %499 = vmatprep.mubr.bf16.mxu0 0
      %500 = vmatmul.mubr.bf16.gmra.mrb[0].mxu0 %v362
      %v501 = vpop.f32.mrb[0].mxu0
      %v502 = vadd.f32 %v322, %v501
      %v503 = vpop.f32.mrb[0].mxu0
      %v504 = vadd.f32 %v326, %v503
      %v505 = vpop.f32.mrb[0].mxu0
      %v506 = vadd.f32 %v322, %v505
      %v507 = vpop.f32.mrb[0].mxu0
      %v508 = vadd.f32 %v326, %v507
      %509 = vmatprep.mubr.bf16.mxu0 0
      %510 = vmatmul.mubr.bf16.gmra.mrb[0].mxu0 %v363
      %v511 = vpop.f32.mrb[0].mxu0
      %v512 = vadd.f32 %v322, %v511
      %v513 = vpop.f32.mrb[0].mxu0
      %v514 = vadd.f32 %v326, %v513
      %v515 = vpop.f32.mrb[0].mxu0
      %v516 = vadd.f32 %v322, %v515
      %v517 = vpop.f32.mrb[0].mxu0
      %v518 = vadd.f32 %v326, %v517
      %519 = vmatprep.mubr.bf16.mxu0 0
      %520 = vmatmul.mubr.bf16.gmra.mrb[0].mxu0 %v364
      %v521 = vpop.f32.mrb[0].mxu0
      %v522 = vadd.f32 %v322, %v521
      %v523 = vpop.f32.mrb[0].mxu0
      %v524 = vadd.f32 %v326, %v523
      %v525 = vpop.f32.mrb[0].mxu0
      %v526 = vadd.f32 %v322, %v525
      %v527 = vpop.f32.mrb[0].mxu0
      %v528 = vadd.f32 %v326, %v527
      %529 = vmatprep.mubr.bf16.mxu0 0
      %530 = vmatmul.mubr.bf16.gmra.mrb[0].mxu0 %v365
      %v531 = vpop.f32.mrb[0].mxu0
      %v532 = vadd.f32 %v322, %v531
      %v533 = vpop.f32.mrb[0].mxu0
      %v534 = vadd.f32 %v326, %v533
      %v535 = vpop.f32.mrb[0].mxu0
      %v536 = vadd.f32 %v322, %v535
      %v537 = vpop.f32.mrb[0].mxu0
      %v538 = vadd.f32 %v326, %v537
      %539 = vmatprep.mubr.bf16.mxu0 0
      %540 = vmatmul.mubr.bf16.gmra.mrb[0].mxu0 %v366
      %v541 = vpop.f32.mrb[0].mxu0
      %v542 = vadd.f32 %v322, %v541
      %v543 = vpop.f32.mrb[0].mxu0
      %v544 = vadd.f32 %v326, %v543
      %v545 = vpop.f32.mrb[0].mxu0
      %v546 = vadd.f32 %v322, %v545
      %v547 = vpop.f32.mrb[0].mxu0
      %v548 = vadd.f32 %v326, %v547
      %549 = vmatprep.mubr.bf16.mxu0 0
      %550 = vmatmul.mubr.bf16.gmra.mrb[0].mxu0 %v367
      %v551 = vpop.f32.mrb[0].mxu0
      %v552 = vadd.f32 %v322, %v551
      %v553 = vpop.f32.mrb[0].mxu0
      %v554 = vadd.f32 %v326, %v553
      %v555 = vpop.f32.mrb[0].mxu0
      %v556 = vadd.f32 %v322, %v555
      %v557 = vpop.f32.mrb[0].mxu0
      %v558 = vadd.f32 %v326, %v557
      %559 = vmatprep.mubr.bf16.mxu0 0
      %560 = vmatmul.mubr.bf16.gmra.mrb[0].mxu0 %v368
      %v561 = vpop.f32.mrb[0].mxu0
      %v562 = vadd.f32 %v322, %v561
      %v563 = vpop.f32.mrb[0].mxu0
      %v564 = vadd.f32 %v326, %v563
      %v565 = vpop.f32.mrb[0].mxu0
      %v566 = vadd.f32 %v322, %v565
      %v567 = vpop.f32.mrb[0].mxu0
      %v568 = vadd.f32 %v326, %v567
      %569 = vdwg.mxu0
      %vm570 = vcmp.gt.f32.partialorder %v492, 20.0
      %vm571 = vcmp.gt.f32.partialorder %v494, 20.0
      %vm572 = vcmp.gt.f32.partialorder %v496, 20.0
      %vm573 = vcmp.gt.f32.partialorder %v498, 20.0
      %vm574 = vcmp.gt.f32.partialorder %v502, 20.0
      %vm575 = vcmp.gt.f32.partialorder %v504, 20.0
      %vm576 = vcmp.gt.f32.partialorder %v506, 20.0
      %vm577 = vcmp.gt.f32.partialorder %v508, 20.0
      %vm578 = vcmp.gt.f32.partialorder %v512, 20.0
      %vm579 = vcmp.gt.f32.partialorder %v514, 20.0
      %vm580 = vcmp.gt.f32.partialorder %v516, 20.0
      %vm581 = vcmp.gt.f32.partialorder %v518, 20.0
      %vm582 = vcmp.gt.f32.partialorder %v522, 20.0
      %vm583 = vcmp.gt.f32.partialorder %v524, 20.0
      %vm584 = vcmp.gt.f32.partialorder %v526, 20.0
      %vm585 = vcmp.gt.f32.partialorder %v528, 20.0
      %vm586 = vcmp.gt.f32.partialorder %v532, 20.0
      %vm587 = vcmp.gt.f32.partialorder %v534, 20.0
      %vm588 = vcmp.gt.f32.partialorder %v536, 20.0
      %vm589 = vcmp.gt.f32.partialorder %v538, 20.0
      %vm590 = vcmp.gt.f32.partialorder %v542, 20.0
      %vm591 = vcmp.gt.f32.partialorder %v544, 20.0
      %vm592 = vcmp.gt.f32.partialorder %v546, 20.0
      %vm593 = vcmp.gt.f32.partialorder %v548, 20.0
      %vm594 = vcmp.gt.f32.partialorder %v552, 20.0
      %vm595 = vcmp.gt.f32.partialorder %v554, 20.0
      %vm596 = vcmp.gt.f32.partialorder %v556, 20.0
      %vm597 = vcmp.gt.f32.partialorder %v558, 20.0
      %vm598 = vcmp.gt.f32.partialorder %v562, 20.0
      %vm599 = vcmp.gt.f32.partialorder %v564, 20.0
      %vm600 = vcmp.gt.f32.partialorder %v566, 20.0
      %vm601 = vcmp.gt.f32.partialorder %v568, 20.0
      %v602 = vmin.f32 %v492, 20.0
      %v603 = vmin.f32 %v494, 20.0
      %v604 = vmin.f32 %v496, 20.0
      %v605 = vmin.f32 %v498, 20.0
      %v606 = vmin.f32 %v502, 20.0
      %v607 = vmin.f32 %v504, 20.0
      %v608 = vmin.f32 %v506, 20.0
      %v609 = vmin.f32 %v508, 20.0
      %v610 = vmin.f32 %v512, 20.0
      %v611 = vmin.f32 %v514, 20.0
      %v612 = vmin.f32 %v516, 20.0
      %v613 = vmin.f32 %v518, 20.0
      %v614 = vmin.f32 %v522, 20.0
      %v615 = vmin.f32 %v524, 20.0
      %v616 = vmin.f32 %v526, 20.0
      %v617 = vmin.f32 %v528, 20.0
      %v618 = vmin.f32 %v532, 20.0
      %v619 = vmin.f32 %v534, 20.0
      %v620 = vmin.f32 %v536, 20.0
      %v621 = vmin.f32 %v538, 20.0
      %v622 = vmin.f32 %v542, 20.0
      %v623 = vmin.f32 %v544, 20.0
      %v624 = vmin.f32 %v546, 20.0
      %v625 = vmin.f32 %v548, 20.0
      %v626 = vmin.f32 %v552, 20.0
      %v627 = vmin.f32 %v554, 20.0
      %v628 = vmin.f32 %v556, 20.0
      %v629 = vmin.f32 %v558, 20.0
      %v630 = vmin.f32 %v562, 20.0
      %v631 = vmin.f32 %v564, 20.0
      %v632 = vmin.f32 %v566, 20.0
      %v633 = vmin.f32 %v568, 20.0
      %v634 = vmul.f32 %v602, 1.442695
      %v635 = vpow.pop %v634
      %v636 = vmul.f32 %v603, 1.442695
      %v637 = vpow.pop %v636
      %v638 = vmul.f32 %v604, 1.442695
      %v639 = vpow.pop %v638
      %v640 = vmul.f32 %v605, 1.442695
      %v641 = vpow.pop %v640
      %v642 = vmul.f32 %v606, 1.442695
      %v643 = vpow.pop %v642
      %v644 = vmul.f32 %v607, 1.442695
      %v645 = vpow.pop %v644
      %v646 = vmul.f32 %v608, 1.442695
      %v647 = vpow.pop %v646
      %v648 = vmul.f32 %v609, 1.442695
      %v649 = vpow.pop %v648
      %v650 = vmul.f32 %v610, 1.442695
      %v651 = vpow.pop %v650
      %v652 = vmul.f32 %v611, 1.442695
      %v653 = vpow.pop %v652
      %v654 = vmul.f32 %v612, 1.442695
      %v655 = vpow.pop %v654
      %v656 = vmul.f32 %v613, 1.442695
      %v657 = vpow.pop %v656
      %v658 = vmul.f32 %v614, 1.442695
      %v659 = vpow.pop %v658
      %v660 = vmul.f32 %v615, 1.442695
      %v661 = vpow.pop %v660
      %v662 = vmul.f32 %v616, 1.442695
      %v663 = vpow.pop %v662
      %v664 = vmul.f32 %v617, 1.442695
      %v665 = vpow.pop %v664
      %v666 = vmul.f32 %v618, 1.442695
      %v667 = vpow.pop %v666
      %v668 = vmul.f32 %v619, 1.442695
      %v669 = vpow.pop %v668
      %v670 = vmul.f32 %v620, 1.442695
      %v671 = vpow.pop %v670
      %v672 = vmul.f32 %v621, 1.442695
      %v673 = vpow.pop %v672
      %v674 = vmul.f32 %v622, 1.442695
      %v675 = vpow.pop %v674
      %v676 = vmul.f32 %v623, 1.442695
      %v677 = vpow.pop %v676
      %v678 = vmul.f32 %v624, 1.442695
      %v679 = vpow.pop %v678
      %v680 = vmul.f32 %v625, 1.442695
      %v681 = vpow.pop %v680
      %v682 = vmul.f32 %v626, 1.442695
      %v683 = vpow.pop %v682
      %v684 = vmul.f32 %v627, 1.442695
      %v685 = vpow.pop %v684
      %v686 = vmul.f32 %v628, 1.442695
      %v687 = vpow.pop %v686
      %v688 = vmul.f32 %v629, 1.442695
      %v689 = vpow.pop %v688
      %v690 = vmul.f32 %v630, 1.442695
      %v691 = vpow.pop %v690
      %v692 = vmul.f32 %v631, 1.442695
      %v693 = vpow.pop %v692
      %v694 = vmul.f32 %v632, 1.442695
      %v695 = vpow.pop %v694
      %v696 = vmul.f32 %v633, 1.442695
      %v697 = vpow.pop %v696
      %v698 = vadd.f32 %v635, 1.0
      %v699 = vlog2.pop %v698
      %v700 = vmul.f32 %v699, 0.6931472
      %v701 = vmul.f32 -0.5, %v635
      %v702 = vadd.f32 %v701, 1.0
      %v703 = vmul.f32 %v702, %v635
      %v704 = vand.u32 2147483647, %v635
      %vm705 = vcmp.lt.f32.partialorder %v704, 0.0004427343
      %v706 = vsel %vm705, %v703, %v700
      %v707 = vadd.f32 %v637, 1.0
      %v708 = vlog2.pop %v707
      %v709 = vmul.f32 %v708, 0.6931472
      %v710 = vmul.f32 -0.5, %v637
      %v711 = vadd.f32 %v710, 1.0
      %v712 = vmul.f32 %v711, %v637
      %v713 = vand.u32 2147483647, %v637
      %vm714 = vcmp.lt.f32.partialorder %v713, 0.0004427343
      %v715 = vsel %vm714, %v712, %v709
      %v716 = vadd.f32 %v639, 1.0
      %v717 = vlog2.pop %v716
      %v718 = vmul.f32 %v717, 0.6931472
      %v719 = vmul.f32 -0.5, %v639
      %v720 = vadd.f32 %v719, 1.0
      %v721 = vmul.f32 %v720, %v639
      %v722 = vand.u32 2147483647, %v639
      %vm723 = vcmp.lt.f32.partialorder %v722, 0.0004427343
      %v724 = vsel %vm723, %v721, %v718
      %v725 = vadd.f32 %v641, 1.0
      %v726 = vlog2.pop %v725
      %v727 = vmul.f32 %v726, 0.6931472
      %v728 = vmul.f32 -0.5, %v641
      %v729 = vadd.f32 %v728, 1.0
      %v730 = vmul.f32 %v729, %v641
      %v731 = vand.u32 2147483647, %v641
      %vm732 = vcmp.lt.f32.partialorder %v731, 0.0004427343
      %v733 = vsel %vm732, %v730, %v727
      %v734 = vadd.f32 %v643, 1.0
      %v735 = vlog2.pop %v734
      %v736 = vmul.f32 %v735, 0.6931472
      %v737 = vmul.f32 -0.5, %v643
      %v738 = vadd.f32 %v737, 1.0
      %v739 = vmul.f32 %v738, %v643
      %v740 = vand.u32 2147483647, %v643
      %vm741 = vcmp.lt.f32.partialorder %v740, 0.0004427343
      %v742 = vsel %vm741, %v739, %v736
      %v743 = vadd.f32 %v645, 1.0
      %v744 = vlog2.pop %v743
      %v745 = vmul.f32 %v744, 0.6931472
      %v746 = vmul.f32 -0.5, %v645
      %v747 = vadd.f32 %v746, 1.0
      %v748 = vmul.f32 %v747, %v645
      %v749 = vand.u32 2147483647, %v645
      %vm750 = vcmp.lt.f32.partialorder %v749, 0.0004427343
      %v751 = vsel %vm750, %v748, %v745
      %v752 = vadd.f32 %v647, 1.0
      %v753 = vlog2.pop %v752
      %v754 = vmul.f32 %v753, 0.6931472
      %v755 = vmul.f32 -0.5, %v647
      %v756 = vadd.f32 %v755, 1.0
      %v757 = vmul.f32 %v756, %v647
      %v758 = vand.u32 2147483647, %v647
      %vm759 = vcmp.lt.f32.partialorder %v758, 0.0004427343
      %v760 = vsel %vm759, %v757, %v754
      %v761 = vadd.f32 %v649, 1.0
      %v762 = vlog2.pop %v761
      %v763 = vmul.f32 %v762, 0.6931472
      %v764 = vmul.f32 -0.5, %v649
      %v765 = vadd.f32 %v764, 1.0
      %v766 = vmul.f32 %v765, %v649
      %v767 = vand.u32 2147483647, %v649
      %vm768 = vcmp.lt.f32.partialorder %v767, 0.0004427343
      %v769 = vsel %vm768, %v766, %v763
      %v770 = vadd.f32 %v651, 1.0
      %v771 = vlog2.pop %v770
      %v772 = vmul.f32 %v771, 0.6931472
      %v773 = vmul.f32 -0.5, %v651
      %v774 = vadd.f32 %v773, 1.0
      %v775 = vmul.f32 %v774, %v651
      %v776 = vand.u32 2147483647, %v651
      %vm777 = vcmp.lt.f32.partialorder %v776, 0.0004427343
      %v778 = vsel %vm777, %v775, %v772
      %v779 = vadd.f32 %v653, 1.0
      %v780 = vlog2.pop %v779
      %v781 = vmul.f32 %v780, 0.6931472
      %v782 = vmul.f32 -0.5, %v653
      %v783 = vadd.f32 %v782, 1.0
      %v784 = vmul.f32 %v783, %v653
      %v785 = vand.u32 2147483647, %v653
      %vm786 = vcmp.lt.f32.partialorder %v785, 0.0004427343
      %v787 = vsel %vm786, %v784, %v781
      %v788 = vadd.f32 %v655, 1.0
      %v789 = vlog2.pop %v788
      %v790 = vmul.f32 %v789, 0.6931472
      %v791 = vmul.f32 -0.5, %v655
      %v792 = vadd.f32 %v791, 1.0
      %v793 = vmul.f32 %v792, %v655
      %v794 = vand.u32 2147483647, %v655
      %vm795 = vcmp.lt.f32.partialorder %v794, 0.0004427343
      %v796 = vsel %vm795, %v793, %v790
      %v797 = vadd.f32 %v657, 1.0
      %v798 = vlog2.pop %v797
      %v799 = vmul.f32 %v798, 0.6931472
      %v800 = vmul.f32 -0.5, %v657
      %v801 = vadd.f32 %v800, 1.0
      %v802 = vmul.f32 %v801, %v657
      %v803 = vand.u32 2147483647, %v657
      %vm804 = vcmp.lt.f32.partialorder %v803, 0.0004427343
      %v805 = vsel %vm804, %v802, %v799
      %v806 = vadd.f32 %v659, 1.0
      %v807 = vlog2.pop %v806
      %v808 = vmul.f32 %v807, 0.6931472
      %v809 = vmul.f32 -0.5, %v659
      %v810 = vadd.f32 %v809, 1.0
      %v811 = vmul.f32 %v810, %v659
      %v812 = vand.u32 2147483647, %v659
      %vm813 = vcmp.lt.f32.partialorder %v812, 0.0004427343
      %v814 = vsel %vm813, %v811, %v808
      %v815 = vadd.f32 %v661, 1.0
      %v816 = vlog2.pop %v815
      %v817 = vmul.f32 %v816, 0.6931472
      %v818 = vmul.f32 -0.5, %v661
      %v819 = vadd.f32 %v818, 1.0
      %v820 = vmul.f32 %v819, %v661
      %v821 = vand.u32 2147483647, %v661
      %vm822 = vcmp.lt.f32.partialorder %v821, 0.0004427343
      %v823 = vsel %vm822, %v820, %v817
      %v824 = vadd.f32 %v663, 1.0
      %v825 = vlog2.pop %v824
      %v826 = vmul.f32 %v825, 0.6931472
      %v827 = vmul.f32 -0.5, %v663
      %v828 = vadd.f32 %v827, 1.0
      %v829 = vmul.f32 %v828, %v663
      %v830 = vand.u32 2147483647, %v663
      %vm831 = vcmp.lt.f32.partialorder %v830, 0.0004427343
      %v832 = vsel %vm831, %v829, %v826
      %v833 = vadd.f32 %v665, 1.0
      %v834 = vlog2.pop %v833
      %v835 = vmul.f32 %v834, 0.6931472
      %v836 = vmul.f32 -0.5, %v665
      %v837 = vadd.f32 %v836, 1.0
      %v838 = vmul.f32 %v837, %v665
      %v839 = vand.u32 2147483647, %v665
      %vm840 = vcmp.lt.f32.partialorder %v839, 0.0004427343
      %v841 = vsel %vm840, %v838, %v835
      %v842 = vadd.f32 %v667, 1.0
      %v843 = vlog2.pop %v842
      %v844 = vmul.f32 %v843, 0.6931472
      %v845 = vmul.f32 -0.5, %v667
      %v846 = vadd.f32 %v845, 1.0
      %v847 = vmul.f32 %v846, %v667
      %v848 = vand.u32 2147483647, %v667
      %vm849 = vcmp.lt.f32.partialorder %v848, 0.0004427343
      %v850 = vsel %vm849, %v847, %v844
      %v851 = vadd.f32 %v669, 1.0
      %v852 = vlog2.pop %v851
      %v853 = vmul.f32 %v852, 0.6931472
      %v854 = vmul.f32 -0.5, %v669
      %v855 = vadd.f32 %v854, 1.0
      %v856 = vmul.f32 %v855, %v669
      %v857 = vand.u32 2147483647, %v669
      %vm858 = vcmp.lt.f32.partialorder %v857, 0.0004427343
      %v859 = vsel %vm858, %v856, %v853
      %v860 = vadd.f32 %v671, 1.0
      %v861 = vlog2.pop %v860
      %v862 = vmul.f32 %v861, 0.6931472
      %v863 = vmul.f32 -0.5, %v671
      %v864 = vadd.f32 %v863, 1.0
      %v865 = vmul.f32 %v864, %v671
      %v866 = vand.u32 2147483647, %v671
      %vm867 = vcmp.lt.f32.partialorder %v866, 0.0004427343
      %v868 = vsel %vm867, %v865, %v862
      %v869 = vadd.f32 %v673, 1.0
      %v870 = vlog2.pop %v869
      %v871 = vmul.f32 %v870, 0.6931472
      %v872 = vmul.f32 -0.5, %v673
      %v873 = vadd.f32 %v872, 1.0
      %v874 = vmul.f32 %v873, %v673
      %v875 = vand.u32 2147483647, %v673
      %vm876 = vcmp.lt.f32.partialorder %v875, 0.0004427343
      %v877 = vsel %vm876, %v874, %v871
      %v878 = vadd.f32 %v675, 1.0
      %v879 = vlog2.pop %v878
      %v880 = vmul.f32 %v879, 0.6931472
      %v881 = vmul.f32 -0.5, %v675
      %v882 = vadd.f32 %v881, 1.0
      %v883 = vmul.f32 %v882, %v675
      %v884 = vand.u32 2147483647, %v675
      %vm885 = vcmp.lt.f32.partialorder %v884, 0.0004427343
      %v886 = vsel %vm885, %v883, %v880
      %v887 = vadd.f32 %v677, 1.0
      %v888 = vlog2.pop %v887
      %v889 = vmul.f32 %v888, 0.6931472
      %v890 = vmul.f32 -0.5, %v677
      %v891 = vadd.f32 %v890, 1.0
      %v892 = vmul.f32 %v891, %v677
      %v893 = vand.u32 2147483647, %v677
      %vm894 = vcmp.lt.f32.partialorder %v893, 0.0004427343
      %v895 = vsel %vm894, %v892, %v889
      %v896 = vadd.f32 %v679, 1.0
      %v897 = vlog2.pop %v896
      %v898 = vmul.f32 %v897, 0.6931472
      %v899 = vmul.f32 -0.5, %v679
      %v900 = vadd.f32 %v899, 1.0
      %v901 = vmul.f32 %v900, %v679
      %v902 = vand.u32 2147483647, %v679
      %vm903 = vcmp.lt.f32.partialorder %v902, 0.0004427343
      %v904 = vsel %vm903, %v901, %v898
      %v905 = vadd.f32 %v681, 1.0
      %v906 = vlog2.pop %v905
      %v907 = vmul.f32 %v906, 0.6931472
      %v908 = vmul.f32 -0.5, %v681
      %v909 = vadd.f32 %v908, 1.0
      %v910 = vmul.f32 %v909, %v681
      %v911 = vand.u32 2147483647, %v681
      %vm912 = vcmp.lt.f32.partialorder %v911, 0.0004427343
      %v913 = vsel %vm912, %v910, %v907
      %v914 = vadd.f32 %v683, 1.0
      %v915 = vlog2.pop %v914
      %v916 = vmul.f32 %v915, 0.6931472
      %v917 = vmul.f32 -0.5, %v683
      %v918 = vadd.f32 %v917, 1.0
      %v919 = vmul.f32 %v918, %v683
      %v920 = vand.u32 2147483647, %v683
      %vm921 = vcmp.lt.f32.partialorder %v920, 0.0004427343
      %v922 = vsel %vm921, %v919, %v916
      %v923 = vadd.f32 %v685, 1.0
      %v924 = vlog2.pop %v923
      %v925 = vmul.f32 %v924, 0.6931472
      %v926 = vmul.f32 -0.5, %v685
      %v927 = vadd.f32 %v926, 1.0
      %v928 = vmul.f32 %v927, %v685
      %v929 = vand.u32 2147483647, %v685
      %vm930 = vcmp.lt.f32.partialorder %v929, 0.0004427343
      %v931 = vsel %vm930, %v928, %v925
      %v932 = vadd.f32 %v687, 1.0
      %v933 = vlog2.pop %v932
      %v934 = vmul.f32 %v933, 0.6931472
      %v935 = vmul.f32 -0.5, %v687
      %v936 = vadd.f32 %v935, 1.0
      %v937 = vmul.f32 %v936, %v687
      %v938 = vand.u32 2147483647, %v687
      %vm939 = vcmp.lt.f32.partialorder %v938, 0.0004427343
      %v940 = vsel %vm939, %v937, %v934
      %v941 = vadd.f32 %v689, 1.0
      %v942 = vlog2.pop %v941
      %v943 = vmul.f32 %v942, 0.6931472
      %v944 = vmul.f32 -0.5, %v689
      %v945 = vadd.f32 %v944, 1.0
      %v946 = vmul.f32 %v945, %v689
      %v947 = vand.u32 2147483647, %v689
      %vm948 = vcmp.lt.f32.partialorder %v947, 0.0004427343
      %v949 = vsel %vm948, %v946, %v943
      %v950 = vadd.f32 %v691, 1.0
      %v951 = vlog2.pop %v950
      %v952 = vmul.f32 %v951, 0.6931472
      %v953 = vmul.f32 -0.5, %v691
      %v954 = vadd.f32 %v953, 1.0
      %v955 = vmul.f32 %v954, %v691
      %v956 = vand.u32 2147483647, %v691
      %vm957 = vcmp.lt.f32.partialorder %v956, 0.0004427343
      %v958 = vsel %vm957, %v955, %v952
      %v959 = vadd.f32 %v693, 1.0
      %v960 = vlog2.pop %v959
      %v961 = vmul.f32 %v960, 0.6931472
      %v962 = vmul.f32 -0.5, %v693
      %v963 = vadd.f32 %v962, 1.0
      %v964 = vmul.f32 %v963, %v693
      %v965 = vand.u32 2147483647, %v693
      %vm966 = vcmp.lt.f32.partialorder %v965, 0.0004427343
      %v967 = vsel %vm966, %v964, %v961
      %v968 = vadd.f32 %v695, 1.0
      %v969 = vlog2.pop %v968
      %v970 = vmul.f32 %v969, 0.6931472
      %v971 = vmul.f32 -0.5, %v695
      %v972 = vadd.f32 %v971, 1.0
      %v973 = vmul.f32 %v972, %v695
      %v974 = vand.u32 2147483647, %v695
      %vm975 = vcmp.lt.f32.partialorder %v974, 0.0004427343
      %v976 = vsel %vm975, %v973, %v970
      %v977 = vadd.f32 %v697, 1.0
      %v978 = vlog2.pop %v977
      %v979 = vmul.f32 %v978, 0.6931472
      %v980 = vmul.f32 -0.5, %v697
      %v981 = vadd.f32 %v980, 1.0
      %v982 = vmul.f32 %v981, %v697
      %v983 = vand.u32 2147483647, %v697
      %vm984 = vcmp.lt.f32.partialorder %v983, 0.0004427343
      %v985 = vsel %vm984, %v982, %v979
      %v986 = vsel %vm570, %v492, %v706
      %v987 = vsel %vm571, %v494, %v715
      %v988 = vsel %vm572, %v496, %v724
      %v989 = vsel %vm573, %v498, %v733
      %v990 = vsel %vm574, %v502, %v742
      %v991 = vsel %vm575, %v504, %v751
      %v992 = vsel %vm576, %v506, %v760
      %v993 = vsel %vm577, %v508, %v769
      %v994 = vsel %vm578, %v512, %v778
      %v995 = vsel %vm579, %v514, %v787
      %v996 = vsel %vm580, %v516, %v796
      %v997 = vsel %vm581, %v518, %v805
      %v998 = vsel %vm582, %v522, %v814
      %v999 = vsel %vm583, %v524, %v823
      %v1000 = vsel %vm584, %v526, %v832
      %v1001 = vsel %vm585, %v528, %v841
      %v1002 = vsel %vm586, %v532, %v850
      %v1003 = vsel %vm587, %v534, %v859
      %v1004 = vsel %vm588, %v536, %v868
      %v1005 = vsel %vm589, %v538, %v877
      %v1006 = vsel %vm590, %v542, %v886
      %v1007 = vsel %vm591, %v544, %v895
      %v1008 = vsel %vm592, %v546, %v904
      %v1009 = vsel %vm593, %v548, %v913
      %v1010 = vsel %vm594, %v552, %v922
      %v1011 = vsel %vm595, %v554, %v931
      %v1012 = vsel %vm596, %v556, %v940
      %v1013 = vsel %vm597, %v558, %v949
      %v1014 = vsel %vm598, %v562, %v958
      %v1015 = vsel %vm599, %v564, %v967
      %v1016 = vsel %vm600, %v566, %v976
      %v1017 = vsel %vm601, %v568, %v985
      %v1018 = vpack.c.bf16 %v988, %v986
      %v1019 = vpack.c.bf16 %v989, %v987
      %v1020 = vpack.c.bf16 %v992, %v990
      %v1021 = vpack.c.bf16 %v993, %v991
      %v1022 = vpack.c.bf16 %v996, %v994
      %v1023 = vpack.c.bf16 %v997, %v995
      %v1024 = vpack.c.bf16 %v1000, %v998
      %v1025 = vpack.c.bf16 %v1001, %v999
      %v1026 = vpack.c.bf16 %v1004, %v1002
      %v1027 = vpack.c.bf16 %v1005, %v1003
      %v1028 = vpack.c.bf16 %v1008, %v1006
      %v1029 = vpack.c.bf16 %v1009, %v1007
      %v1030 = vpack.c.bf16 %v1012, %v1010
      %v1031 = vpack.c.bf16 %v1013, %v1011
      %v1032 = vpack.c.bf16 %v1016, %v1014
      %v1033 = vpack.c.bf16 %v1017, %v1015
      %v1034 = vld [vmem:[%s3] sm:$0xf]
      %v1035 = vld [vmem:[%s3 + $0x4] sm:$0xf]
      %v1036 = vld [vmem:[%s3 + $0x8] sm:$0xf]
      %v1037 = vld [vmem:[%s3 + $0xc] sm:$0xf]
      %v1038 = vld [vmem:[%s3 + $0x10] sm:$0xf]
      %v1039 = vld [vmem:[%s3 + $0x14] sm:$0xf]
      %v1040 = vld [vmem:[%s3 + $0x18] sm:$0xf]
      %v1041 = vld [vmem:[%s3 + $0x1c] sm:$0xf]
      %v1042 = vld [vmem:[%s3 + $0x20] sm:$0xf]
      %v1043 = vld [vmem:[%s3 + $0x24] sm:$0xf]
      %v1044 = vld [vmem:[%s3 + $0x28] sm:$0xf]
      %v1045 = vld [vmem:[%s3 + $0x2c] sm:$0xf]
      %v1046 = vld [vmem:[%s3 + $0x30] sm:$0xf]
      %v1047 = vld [vmem:[%s3 + $0x34] sm:$0xf]
      %v1048 = vld [vmem:[%s3 + $0x38] sm:$0xf]
      %v1049 = vld [vmem:[%s3 + $0x3c] sm:$0xf]
      %v1050 = vld [vmem:[%s3 + $0x40] sm:$0xf]
      %v1051 = vld [vmem:[%s3 + $0x44] sm:$0xf]
      %v1052 = vld [vmem:[%s3 + $0x48] sm:$0xf]
      %v1053 = vld [vmem:[%s3 + $0x4c] sm:$0xf]
      %v1054 = vld [vmem:[%s3 + $0x50] sm:$0xf]
      %v1055 = vld [vmem:[%s3 + $0x54] sm:$0xf]
      %v1056 = vld [vmem:[%s3 + $0x58] sm:$0xf]
      %v1057 = vld [vmem:[%s3 + $0x5c] sm:$0xf]
      %v1058 = vld [vmem:[%s3 + $0x60] sm:$0xf]
      %v1059 = vld [vmem:[%s3 + $0x64] sm:$0xf]
      %v1060 = vld [vmem:[%s3 + $0x68] sm:$0xf]
      %v1061 = vld [vmem:[%s3 + $0x6c] sm:$0xf]
      %v1062 = vld [vmem:[%s3 + $0x70] sm:$0xf]
      %v1063 = vld [vmem:[%s3 + $0x74] sm:$0xf]
      %v1064 = vld [vmem:[%s3 + $0x78] sm:$0xf]
      %v1065 = vld [vmem:[%s3 + $0x7c] sm:$0xf]
      %v1067 = vlaneseq
      %v1068 = vshrl.u32 %v1067, 7
      %v1069 = vsub.s32 0, %v1068
      %v1070 = vrot.slane %v300, %v1069
      %v1104 = vunpack.c.l.b16 %v1034
      %v1105 = vunpack.c.l.b16 %v1035
      %v1106 = vunpack.c.l.b16 %v1036
      %v1107 = vunpack.c.l.b16 %v1037
      %v1108 = vunpack.c.l.b16 %v1038
      %v1109 = vunpack.c.l.b16 %v1039
      %v1110 = vunpack.c.l.b16 %v1040
      %v1111 = vunpack.c.l.b16 %v1041
      %v1112 = vunpack.c.l.b16 %v1042
      %v1113 = vunpack.c.l.b16 %v1043
      %v1114 = vunpack.c.l.b16 %v1044
      %v1115 = vunpack.c.l.b16 %v1045
      %v1116 = vunpack.c.l.b16 %v1046
      %v1117 = vunpack.c.l.b16 %v1047
      %v1118 = vunpack.c.l.b16 %v1048
      %v1119 = vunpack.c.l.b16 %v1049
      %v1120 = vunpack.c.l.b16 %v1050
      %v1121 = vunpack.c.l.b16 %v1051
      %v1122 = vunpack.c.l.b16 %v1052
      %v1123 = vunpack.c.l.b16 %v1053
      %v1124 = vunpack.c.l.b16 %v1054
      %v1125 = vunpack.c.l.b16 %v1055
      %v1126 = vunpack.c.l.b16 %v1056
      %v1127 = vunpack.c.l.b16 %v1057
      %v1128 = vunpack.c.l.b16 %v1058
      %v1129 = vunpack.c.l.b16 %v1059
      %v1130 = vunpack.c.l.b16 %v1060
      %v1131 = vunpack.c.l.b16 %v1061
      %v1132 = vunpack.c.l.b16 %v1062
      %v1133 = vunpack.c.l.b16 %v1063
      %v1134 = vunpack.c.l.b16 %v1064
      %v1135 = vunpack.c.l.b16 %v1065
      %v1136 = vpack.c.b16 %v1105, %v1104
      %v1137 = vpack.c.b16 %v1107, %v1106
      %v1138 = vpack.c.b16 %v1109, %v1108
      %v1139 = vpack.c.b16 %v1111, %v1110
      %v1140 = vpack.c.b16 %v1113, %v1112
      %v1141 = vpack.c.b16 %v1115, %v1114
      %v1142 = vpack.c.b16 %v1117, %v1116
      %v1143 = vpack.c.b16 %v1119, %v1118
      %v1144 = vpack.c.b16 %v1121, %v1120
      %v1145 = vpack.c.b16 %v1123, %v1122
      %v1146 = vpack.c.b16 %v1125, %v1124
      %v1147 = vpack.c.b16 %v1127, %v1126
      %v1148 = vpack.c.b16 %v1129, %v1128
      %v1149 = vpack.c.b16 %v1131, %v1130
      %v1150 = vpack.c.b16 %v1133, %v1132
      %v1151 = vpack.c.b16 %v1135, %v1134
      %1168 = vmatprep.subr.bf16.mxu0 0
      %1169 = vmatpush1.bf16.msra.mxu0 %v1136
      %1170 = vmatprep.subr.bf16.mxu0 0
      %1171 = vmatpush1.bf16.msra.mxu0 %v1137
      %1172 = vmatprep.subr.bf16.mxu0 0
      %1173 = vmatpush1.bf16.msra.mxu0 %v1138
      %1174 = vmatprep.subr.bf16.mxu0 0
      %1175 = vmatpush1.bf16.msra.mxu0 %v1139
      %1176 = vmatprep.subr.bf16.mxu0 0
      %1177 = vmatpush1.bf16.msra.mxu0 %v1140
      %1178 = vmatprep.subr.bf16.mxu0 0
      %1179 = vmatpush1.bf16.msra.mxu0 %v1141
      %1180 = vmatprep.subr.bf16.mxu0 0
      %1181 = vmatpush1.bf16.msra.mxu0 %v1142
      %1182 = vmatprep.subr.bf16.mxu0 0
      %1183 = vmatpush1.bf16.msra.mxu0 %v1143
      %1184 = vmatprep.subr.bf16.mxu0 0
      %1185 = vmatpush1.bf16.msra.mxu0 %v1144
      %1186 = vmatprep.subr.bf16.mxu0 0
      %1187 = vmatpush1.bf16.msra.mxu0 %v1145
      %1188 = vmatprep.subr.bf16.mxu0 0
      %1189 = vmatpush1.bf16.msra.mxu0 %v1146
      %1190 = vmatprep.subr.bf16.mxu0 0
      %1191 = vmatpush1.bf16.msra.mxu0 %v1147
      %1192 = vmatprep.subr.bf16.mxu0 0
      %1193 = vmatpush1.bf16.msra.mxu0 %v1148
      %1194 = vmatprep.subr.bf16.mxu0 0
      %1195 = vmatpush1.bf16.msra.mxu0 %v1149
      %1196 = vmatprep.subr.bf16.mxu0 0
      %1197 = vmatpush1.bf16.msra.mxu0 %v1150
      %1198 = vmatprep.subr.bf16.mxu0 0
      %1199 = vmatpush1.bf16.msra.mxu0 %v1151
      %1200 = vmatprep.mubr.bf16.mxu0 %v1019
      %1201 = vmatmul.mubr.bf16.gmra.mrb[0].mxu0 %v1018
      %v1202 = vpop.f32.mrb[0].mxu0
      %v1203 = vadd.f32 %v1070, %v1202
      %v1204 = vpop.f32.mrb[0].mxu0
      %v1205 = vpop.f32.mrb[0].mxu0
      %v1206 = vadd.f32 %v1070, %v1205
      %v1207 = vpop.f32.mrb[0].mxu0
      %1208 = vmatprep.mubr.bf16.mxu0 %v1021
      %1209 = vmatmul.mubr.bf16.gmra.mrb[0].mxu0 %v1020
      %v1210 = vpop.f32.mrb[0].mxu0
      %v1211 = vadd.f32 %v1070, %v1210
      %v1212 = vpop.f32.mrb[0].mxu0
      %v1213 = vpop.f32.mrb[0].mxu0
      %v1214 = vadd.f32 %v1070, %v1213
      %v1215 = vpop.f32.mrb[0].mxu0
      %1216 = vmatprep.mubr.bf16.mxu0 %v1023
      %1217 = vmatmul.mubr.bf16.gmra.mrb[0].mxu0 %v1022
      %v1218 = vpop.f32.mrb[0].mxu0
      %v1219 = vadd.f32 %v1070, %v1218
      %v1220 = vpop.f32.mrb[0].mxu0
      %v1221 = vpop.f32.mrb[0].mxu0
      %v1222 = vadd.f32 %v1070, %v1221
      %v1223 = vpop.f32.mrb[0].mxu0
      %1224 = vmatprep.mubr.bf16.mxu0 %v1025
      %1225 = vmatmul.mubr.bf16.gmra.mrb[0].mxu0 %v1024
      %v1226 = vpop.f32.mrb[0].mxu0
      %v1227 = vadd.f32 %v1070, %v1226
      %v1228 = vpop.f32.mrb[0].mxu0
      %v1229 = vpop.f32.mrb[0].mxu0
      %v1230 = vadd.f32 %v1070, %v1229
      %v1231 = vpop.f32.mrb[0].mxu0
      %1232 = vmatprep.mubr.bf16.mxu0 %v1027
      %1233 = vmatmul.mubr.bf16.gmra.mrb[0].mxu0 %v1026
      %v1234 = vpop.f32.mrb[0].mxu0
      %v1235 = vadd.f32 %v1070, %v1234
      %v1236 = vpop.f32.mrb[0].mxu0
      %v1237 = vpop.f32.mrb[0].mxu0
      %v1238 = vadd.f32 %v1070, %v1237
      %v1239 = vpop.f32.mrb[0].mxu0
      %1240 = vmatprep.mubr.bf16.mxu0 %v1029
      %1241 = vmatmul.mubr.bf16.gmra.mrb[0].mxu0 %v1028
      %v1242 = vpop.f32.mrb[0].mxu0
      %v1243 = vadd.f32 %v1070, %v1242
      %v1244 = vpop.f32.mrb[0].mxu0
      %v1245 = vpop.f32.mrb[0].mxu0
      %v1246 = vadd.f32 %v1070, %v1245
      %v1247 = vpop.f32.mrb[0].mxu0
      %1248 = vmatprep.mubr.bf16.mxu0 %v1031
      %1249 = vmatmul.mubr.bf16.gmra.mrb[0].mxu0 %v1030
      %v1250 = vpop.f32.mrb[0].mxu0
      %v1251 = vadd.f32 %v1070, %v1250
      %v1252 = vpop.f32.mrb[0].mxu0
      %v1253 = vpop.f32.mrb[0].mxu0
      %v1254 = vadd.f32 %v1070, %v1253
      %v1255 = vpop.f32.mrb[0].mxu0
      %1256 = vmatprep.mubr.bf16.mxu0 %v1033
      %1257 = vmatmul.mubr.bf16.gmra.mrb[0].mxu0 %v1032
      %v1258 = vpop.f32.mrb[0].mxu0
      %v1259 = vadd.f32 %v1070, %v1258
      %v1260 = vpop.f32.mrb[0].mxu0
      %v1261 = vpop.f32.mrb[0].mxu0
      %v1262 = vadd.f32 %v1070, %v1261
      %v1263 = vpop.f32.mrb[0].mxu0
      %1264 = vdwg.mxu0
      %vm1265 = vcmp.gt.f32.partialorder %v1203, 20.0
      %vm1266 = vcmp.gt.f32.partialorder %v1206, 20.0
      %vm1267 = vcmp.gt.f32.partialorder %v1211, 20.0
      %vm1268 = vcmp.gt.f32.partialorder %v1214, 20.0
      %vm1269 = vcmp.gt.f32.partialorder %v1219, 20.0
      %vm1270 = vcmp.gt.f32.partialorder %v1222, 20.0
      %vm1271 = vcmp.gt.f32.partialorder %v1227, 20.0
      %vm1272 = vcmp.gt.f32.partialorder %v1230, 20.0
      %vm1273 = vcmp.gt.f32.partialorder %v1235, 20.0
      %vm1274 = vcmp.gt.f32.partialorder %v1238, 20.0
      %vm1275 = vcmp.gt.f32.partialorder %v1243, 20.0
      %vm1276 = vcmp.gt.f32.partialorder %v1246, 20.0
      %vm1277 = vcmp.gt.f32.partialorder %v1251, 20.0
      %vm1278 = vcmp.gt.f32.partialorder %v1254, 20.0
      %vm1279 = vcmp.gt.f32.partialorder %v1259, 20.0
      %vm1280 = vcmp.gt.f32.partialorder %v1262, 20.0
      %v1281 = vmin.f32 %v1203, 20.0
      %v1282 = vmin.f32 %v1206, 20.0
      %v1283 = vmin.f32 %v1211, 20.0
      %v1284 = vmin.f32 %v1214, 20.0
      %v1285 = vmin.f32 %v1219, 20.0
      %v1286 = vmin.f32 %v1222, 20.0
      %v1287 = vmin.f32 %v1227, 20.0
      %v1288 = vmin.f32 %v1230, 20.0
      %v1289 = vmin.f32 %v1235, 20.0
      %v1290 = vmin.f32 %v1238, 20.0
      %v1291 = vmin.f32 %v1243, 20.0
      %v1292 = vmin.f32 %v1246, 20.0
      %v1293 = vmin.f32 %v1251, 20.0
      %v1294 = vmin.f32 %v1254, 20.0
      %v1295 = vmin.f32 %v1259, 20.0
      %v1296 = vmin.f32 %v1262, 20.0
      %v1297 = vmul.f32 %v1281, 1.442695
      %v1298 = vpow.pop %v1297
      %v1299 = vmul.f32 %v1282, 1.442695
      %v1300 = vpow.pop %v1299
      %v1301 = vmul.f32 %v1283, 1.442695
      %v1302 = vpow.pop %v1301
      %v1303 = vmul.f32 %v1284, 1.442695
      %v1304 = vpow.pop %v1303
      %v1305 = vmul.f32 %v1285, 1.442695
      %v1306 = vpow.pop %v1305
      %v1307 = vmul.f32 %v1286, 1.442695
      %v1308 = vpow.pop %v1307
      %v1309 = vmul.f32 %v1287, 1.442695
      %v1310 = vpow.pop %v1309
      %v1311 = vmul.f32 %v1288, 1.442695
      %v1312 = vpow.pop %v1311
      %v1313 = vmul.f32 %v1289, 1.442695
      %v1314 = vpow.pop %v1313
      %v1315 = vmul.f32 %v1290, 1.442695
      %v1316 = vpow.pop %v1315
      %v1317 = vmul.f32 %v1291, 1.442695
      %v1318 = vpow.pop %v1317
      %v1319 = vmul.f32 %v1292, 1.442695
      %v1320 = vpow.pop %v1319
      %v1321 = vmul.f32 %v1293, 1.442695
      %v1322 = vpow.pop %v1321
      %v1323 = vmul.f32 %v1294, 1.442695
      %v1324 = vpow.pop %v1323
      %v1325 = vmul.f32 %v1295, 1.442695
      %v1326 = vpow.pop %v1325
      %v1327 = vmul.f32 %v1296, 1.442695
      %v1328 = vpow.pop %v1327
      %v1329 = vadd.f32 %v1298, 1.0
      %v1330 = vlog2.pop %v1329
      %v1331 = vmul.f32 %v1330, 0.6931472
      %v1332 = vmul.f32 -0.5, %v1298
      %v1333 = vadd.f32 %v1332, 1.0
      %v1334 = vmul.f32 %v1333, %v1298
      %v1335 = vand.u32 2147483647, %v1298
      %vm1336 = vcmp.lt.f32.partialorder %v1335, 0.0004427343
      %v1337 = vsel %vm1336, %v1334, %v1331
      %v1338 = vadd.f32 %v1300, 1.0
      %v1339 = vlog2.pop %v1338
      %v1340 = vmul.f32 %v1339, 0.6931472
      %v1341 = vmul.f32 -0.5, %v1300
      %v1342 = vadd.f32 %v1341, 1.0
      %v1343 = vmul.f32 %v1342, %v1300
      %v1344 = vand.u32 2147483647, %v1300
      %vm1345 = vcmp.lt.f32.partialorder %v1344, 0.0004427343
      %v1346 = vsel %vm1345, %v1343, %v1340
      %v1347 = vadd.f32 %v1302, 1.0
      %v1348 = vlog2.pop %v1347
      %v1349 = vmul.f32 %v1348, 0.6931472
      %v1350 = vmul.f32 -0.5, %v1302
      %v1351 = vadd.f32 %v1350, 1.0
      %v1352 = vmul.f32 %v1351, %v1302
      %v1353 = vand.u32 2147483647, %v1302
      %vm1354 = vcmp.lt.f32.partialorder %v1353, 0.0004427343
      %v1355 = vsel %vm1354, %v1352, %v1349
      %v1356 = vadd.f32 %v1304, 1.0
      %v1357 = vlog2.pop %v1356
      %v1358 = vmul.f32 %v1357, 0.6931472
      %v1359 = vmul.f32 -0.5, %v1304
      %v1360 = vadd.f32 %v1359, 1.0
      %v1361 = vmul.f32 %v1360, %v1304
      %v1362 = vand.u32 2147483647, %v1304
      %vm1363 = vcmp.lt.f32.partialorder %v1362, 0.0004427343
      %v1364 = vsel %vm1363, %v1361, %v1358
      %v1365 = vadd.f32 %v1306, 1.0
      %v1366 = vlog2.pop %v1365
      %v1367 = vmul.f32 %v1366, 0.6931472
      %v1368 = vmul.f32 -0.5, %v1306
      %v1369 = vadd.f32 %v1368, 1.0
      %v1370 = vmul.f32 %v1369, %v1306
      %v1371 = vand.u32 2147483647, %v1306
      %vm1372 = vcmp.lt.f32.partialorder %v1371, 0.0004427343
      %v1373 = vsel %vm1372, %v1370, %v1367
      %v1374 = vadd.f32 %v1308, 1.0
      %v1375 = vlog2.pop %v1374
      %v1376 = vmul.f32 %v1375, 0.6931472
      %v1377 = vmul.f32 -0.5, %v1308
      %v1378 = vadd.f32 %v1377, 1.0
      %v1379 = vmul.f32 %v1378, %v1308
      %v1380 = vand.u32 2147483647, %v1308
      %vm1381 = vcmp.lt.f32.partialorder %v1380, 0.0004427343
      %v1382 = vsel %vm1381, %v1379, %v1376
      %v1383 = vadd.f32 %v1310, 1.0
      %v1384 = vlog2.pop %v1383
      %v1385 = vmul.f32 %v1384, 0.6931472
      %v1386 = vmul.f32 -0.5, %v1310
      %v1387 = vadd.f32 %v1386, 1.0
      %v1388 = vmul.f32 %v1387, %v1310
      %v1389 = vand.u32 2147483647, %v1310
      %vm1390 = vcmp.lt.f32.partialorder %v1389, 0.0004427343
      %v1391 = vsel %vm1390, %v1388, %v1385
      %v1392 = vadd.f32 %v1312, 1.0
      %v1393 = vlog2.pop %v1392
      %v1394 = vmul.f32 %v1393, 0.6931472
      %v1395 = vmul.f32 -0.5, %v1312
      %v1396 = vadd.f32 %v1395, 1.0
      %v1397 = vmul.f32 %v1396, %v1312
      %v1398 = vand.u32 2147483647, %v1312
      %vm1399 = vcmp.lt.f32.partialorder %v1398, 0.0004427343
      %v1400 = vsel %vm1399, %v1397, %v1394
      %v1401 = vadd.f32 %v1314, 1.0
      %v1402 = vlog2.pop %v1401
      %v1403 = vmul.f32 %v1402, 0.6931472
      %v1404 = vmul.f32 -0.5, %v1314
      %v1405 = vadd.f32 %v1404, 1.0
      %v1406 = vmul.f32 %v1405, %v1314
      %v1407 = vand.u32 2147483647, %v1314
      %vm1408 = vcmp.lt.f32.partialorder %v1407, 0.0004427343
      %v1409 = vsel %vm1408, %v1406, %v1403
      %v1410 = vadd.f32 %v1316, 1.0
      %v1411 = vlog2.pop %v1410
      %v1412 = vmul.f32 %v1411, 0.6931472
      %v1413 = vmul.f32 -0.5, %v1316
      %v1414 = vadd.f32 %v1413, 1.0
      %v1415 = vmul.f32 %v1414, %v1316
      %v1416 = vand.u32 2147483647, %v1316
      %vm1417 = vcmp.lt.f32.partialorder %v1416, 0.0004427343
      %v1418 = vsel %vm1417, %v1415, %v1412
      %v1419 = vadd.f32 %v1318, 1.0
      %v1420 = vlog2.pop %v1419
      %v1421 = vmul.f32 %v1420, 0.6931472
      %v1422 = vmul.f32 -0.5, %v1318
      %v1423 = vadd.f32 %v1422, 1.0
      %v1424 = vmul.f32 %v1423, %v1318
      %v1425 = vand.u32 2147483647, %v1318
      %vm1426 = vcmp.lt.f32.partialorder %v1425, 0.0004427343
      %v1427 = vsel %vm1426, %v1424, %v1421
      %v1428 = vadd.f32 %v1320, 1.0
      %v1429 = vlog2.pop %v1428
      %v1430 = vmul.f32 %v1429, 0.6931472
      %v1431 = vmul.f32 -0.5, %v1320
      %v1432 = vadd.f32 %v1431, 1.0
      %v1433 = vmul.f32 %v1432, %v1320
      %v1434 = vand.u32 2147483647, %v1320
      %vm1435 = vcmp.lt.f32.partialorder %v1434, 0.0004427343
      %v1436 = vsel %vm1435, %v1433, %v1430
      %v1437 = vadd.f32 %v1322, 1.0
      %v1438 = vlog2.pop %v1437
      %v1439 = vmul.f32 %v1438, 0.6931472
      %v1440 = vmul.f32 -0.5, %v1322
      %v1441 = vadd.f32 %v1440, 1.0
      %v1442 = vmul.f32 %v1441, %v1322
      %v1443 = vand.u32 2147483647, %v1322
      %vm1444 = vcmp.lt.f32.partialorder %v1443, 0.0004427343
      %v1445 = vsel %vm1444, %v1442, %v1439
      %v1446 = vadd.f32 %v1324, 1.0
      %v1447 = vlog2.pop %v1446
      %v1448 = vmul.f32 %v1447, 0.6931472
      %v1449 = vmul.f32 -0.5, %v1324
      %v1450 = vadd.f32 %v1449, 1.0
      %v1451 = vmul.f32 %v1450, %v1324
      %v1452 = vand.u32 2147483647, %v1324
      %vm1453 = vcmp.lt.f32.partialorder %v1452, 0.0004427343
      %v1454 = vsel %vm1453, %v1451, %v1448
      %v1455 = vadd.f32 %v1326, 1.0
      %v1456 = vlog2.pop %v1455
      %v1457 = vmul.f32 %v1456, 0.6931472
      %v1458 = vmul.f32 -0.5, %v1326
      %v1459 = vadd.f32 %v1458, 1.0
      %v1460 = vmul.f32 %v1459, %v1326
      %v1461 = vand.u32 2147483647, %v1326
      %vm1462 = vcmp.lt.f32.partialorder %v1461, 0.0004427343
      %v1463 = vsel %vm1462, %v1460, %v1457
      %v1464 = vadd.f32 %v1328, 1.0
      %v1465 = vlog2.pop %v1464
      %v1466 = vmul.f32 %v1465, 0.6931472
      %v1467 = vmul.f32 -0.5, %v1328
      %v1468 = vadd.f32 %v1467, 1.0
      %v1469 = vmul.f32 %v1468, %v1328
      %v1470 = vand.u32 2147483647, %v1328
      %vm1471 = vcmp.lt.f32.partialorder %v1470, 0.0004427343
      %v1472 = vsel %vm1471, %v1469, %v1466
      %v1473 = vsel %vm1265, %v1203, %v1337
      %v1474 = vsel %vm1266, %v1206, %v1346
      %v1475 = vsel %vm1267, %v1211, %v1355
      %v1476 = vsel %vm1268, %v1214, %v1364
      %v1477 = vsel %vm1269, %v1219, %v1373
      %v1478 = vsel %vm1270, %v1222, %v1382
      %v1479 = vsel %vm1271, %v1227, %v1391
      %v1480 = vsel %vm1272, %v1230, %v1400
      %v1481 = vsel %vm1273, %v1235, %v1409
      %v1482 = vsel %vm1274, %v1238, %v1418
      %v1483 = vsel %vm1275, %v1243, %v1427
      %v1484 = vsel %vm1276, %v1246, %v1436
      %v1485 = vsel %vm1277, %v1251, %v1445
      %v1486 = vsel %vm1278, %v1254, %v1454
      %v1487 = vsel %vm1279, %v1259, %v1463
      %v1488 = vsel %vm1280, %v1262, %v1472
      %v1489 = vpack.c.bf16 %v1474, %v1473
      %v1490 = vpack.c.bf16 %v1476, %v1475
      %v1491 = vpack.c.bf16 %v1478, %v1477
      %v1492 = vpack.c.bf16 %v1480, %v1479
      %v1493 = vpack.c.bf16 %v1482, %v1481
      %v1494 = vpack.c.bf16 %v1484, %v1483
      %v1495 = vpack.c.bf16 %v1486, %v1485
      %v1496 = vpack.c.bf16 %v1488, %v1487
      %v1497 = vld [vmem:[%s5] sm:$0xf]
      %v1498 = vld [vmem:[%s5 + $0x4] sm:$0xf]
      %v1499 = vld [vmem:[%s5 + $0x8] sm:$0xf]
      %v1500 = vld [vmem:[%s5 + $0xc] sm:$0xf]
      %v1501 = vld [vmem:[%s5 + $0x10] sm:$0xf]
      %v1502 = vld [vmem:[%s5 + $0x14] sm:$0xf]
      %v1503 = vld [vmem:[%s5 + $0x18] sm:$0xf]
      %v1504 = vld [vmem:[%s5 + $0x1c] sm:$0xf]
      %v1505 = vld [vmem:[%s5 + $0x20] sm:$0xf]
      %v1506 = vld [vmem:[%s5 + $0x24] sm:$0xf]
      %v1507 = vld [vmem:[%s5 + $0x28] sm:$0xf]
      %v1508 = vld [vmem:[%s5 + $0x2c] sm:$0xf]
      %v1509 = vld [vmem:[%s5 + $0x30] sm:$0xf]
      %v1510 = vld [vmem:[%s5 + $0x34] sm:$0xf]
      %v1511 = vld [vmem:[%s5 + $0x38] sm:$0xf]
      %v1512 = vld [vmem:[%s5 + $0x3c] sm:$0xf]
      %v1514 = vlaneseq
      %v1515 = vshrl.u32 %v1514, 7
      %v1516 = vsub.s32 0, %v1515
      %v1517 = vrot.slane %v301, %v1516
      %v1535 = vunpack.c.l.b16 %v1497
      %v1536 = vunpack.c.l.b16 %v1498
      %v1537 = vunpack.c.l.b16 %v1499
      %v1538 = vunpack.c.l.b16 %v1500
      %v1539 = vunpack.c.l.b16 %v1501
      %v1540 = vunpack.c.l.b16 %v1502
      %v1541 = vunpack.c.l.b16 %v1503
      %v1542 = vunpack.c.l.b16 %v1504
      %v1543 = vunpack.c.l.b16 %v1505
      %v1544 = vunpack.c.l.b16 %v1506
      %v1545 = vunpack.c.l.b16 %v1507
      %v1546 = vunpack.c.l.b16 %v1508
      %v1547 = vunpack.c.l.b16 %v1509
      %v1548 = vunpack.c.l.b16 %v1510
      %v1549 = vunpack.c.l.b16 %v1511
      %v1550 = vunpack.c.l.b16 %v1512
      %v1551 = vpack.c.b16 %v1536, %v1535
      %v1552 = vpack.c.b16 %v1538, %v1537
      %v1553 = vpack.c.b16 %v1540, %v1539
      %v1554 = vpack.c.b16 %v1542, %v1541
      %v1555 = vpack.c.b16 %v1544, %v1543
      %v1556 = vpack.c.b16 %v1546, %v1545
      %v1557 = vpack.c.b16 %v1548, %v1547
      %v1558 = vpack.c.b16 %v1550, %v1549
      %1567 = vmatprep.subr.bf16.mxu0 0
      %1568 = vmatpush1.bf16.msra.mxu0 %v1551
      %1569 = vmatprep.subr.bf16.mxu0 0
      %1570 = vmatpush1.bf16.msra.mxu0 %v1552
      %1571 = vmatprep.subr.bf16.mxu0 0
      %1572 = vmatpush1.bf16.msra.mxu0 %v1553
      %1573 = vmatprep.subr.bf16.mxu0 0
      %1574 = vmatpush1.bf16.msra.mxu0 %v1554
      %1575 = vmatprep.subr.bf16.mxu0 0
      %1576 = vmatpush1.bf16.msra.mxu0 %v1555
      %1577 = vmatprep.subr.bf16.mxu0 0
      %1578 = vmatpush1.bf16.msra.mxu0 %v1556
      %1579 = vmatprep.subr.bf16.mxu0 0
      %1580 = vmatpush1.bf16.msra.mxu0 %v1557
      %1581 = vmatprep.subr.bf16.mxu0 0
      %1582 = vmatpush1.bf16.msra.mxu0 %v1558
      %1583 = vmatprep.subr.bf16.mxu0 0
      %1584 = vmatpush1.bf16.msra.mxu0 0
      %1585 = vmatprep.subr.bf16.mxu0 0
      %1586 = vmatpush1.bf16.msra.mxu0 0
      %1587 = vmatprep.subr.bf16.mxu0 0
      %1588 = vmatpush1.bf16.msra.mxu0 0
      %1589 = vmatprep.subr.bf16.mxu0 0
      %1590 = vmatpush1.bf16.msra.mxu0 0
      %1591 = vmatprep.subr.bf16.mxu0 0
      %1592 = vmatpush1.bf16.msra.mxu0 0
      %1593 = vmatprep.subr.bf16.mxu0 0
      %1594 = vmatpush1.bf16.msra.mxu0 0
      %1595 = vmatprep.subr.bf16.mxu0 0
      %1596 = vmatpush1.bf16.msra.mxu0 0
      %1597 = vmatprep.subr.bf16.mxu0 0
      %1598 = vmatpush1.bf16.msra.mxu0 0
      %1599 = vmatprep.mubr.bf16.mxu0 0
      %1600 = vmatmul.mubr.bf16.gmra.mrb[0].mxu0 %v1489
      %v1601 = vpop.f32.mrb[0].mxu0
      %v1602 = vadd.f32 %v1517, %v1601
      %v1603 = vpop.f32.mrb[0].mxu0
      %v1604 = vpop.f32.mrb[0].mxu0
      %v1605 = vadd.f32 %v1517, %v1604
      %v1606 = vpop.f32.mrb[0].mxu0
      %1607 = vmatprep.mubr.bf16.mxu0 0
      %1608 = vmatmul.mubr.bf16.gmra.mrb[0].mxu0 %v1490
      %v1609 = vpop.f32.mrb[0].mxu0
      %v1610 = vadd.f32 %v1517, %v1609
      %v1611 = vpop.f32.mrb[0].mxu0
      %v1612 = vpop.f32.mrb[0].mxu0
      %v1613 = vadd.f32 %v1517, %v1612
      %v1614 = vpop.f32.mrb[0].mxu0
      %1615 = vmatprep.mubr.bf16.mxu0 0
      %1616 = vmatmul.mubr.bf16.gmra.mrb[0].mxu0 %v1491
      %v1617 = vpop.f32.mrb[0].mxu0
      %v1618 = vadd.f32 %v1517, %v1617
      %v1619 = vpop.f32.mrb[0].mxu0
      %v1620 = vpop.f32.mrb[0].mxu0
      %v1621 = vadd.f32 %v1517, %v1620
      %v1622 = vpop.f32.mrb[0].mxu0
      %1623 = vmatprep.mubr.bf16.mxu0 0
      %1624 = vmatmul.mubr.bf16.gmra.mrb[0].mxu0 %v1492
      %v1625 = vpop.f32.mrb[0].mxu0
      %v1626 = vadd.f32 %v1517, %v1625
      %v1627 = vpop.f32.mrb[0].mxu0
      %v1628 = vpop.f32.mrb[0].mxu0
      %v1629 = vadd.f32 %v1517, %v1628
      %v1630 = vpop.f32.mrb[0].mxu0
      %1631 = vmatprep.mubr.bf16.mxu0 0
      %1632 = vmatmul.mubr.bf16.gmra.mrb[0].mxu0 %v1493
      %v1633 = vpop.f32.mrb[0].mxu0
      %v1634 = vadd.f32 %v1517, %v1633
      %v1635 = vpop.f32.mrb[0].mxu0
      %v1636 = vpop.f32.mrb[0].mxu0
      %v1637 = vadd.f32 %v1517, %v1636
      %v1638 = vpop.f32.mrb[0].mxu0
      %1639 = vmatprep.mubr.bf16.mxu0 0
      %1640 = vmatmul.mubr.bf16.gmra.mrb[0].mxu0 %v1494
      %v1641 = vpop.f32.mrb[0].mxu0
      %v1642 = vadd.f32 %v1517, %v1641
      %v1643 = vpop.f32.mrb[0].mxu0
      %v1644 = vpop.f32.mrb[0].mxu0
      %v1645 = vadd.f32 %v1517, %v1644
      %v1646 = vpop.f32.mrb[0].mxu0
      %1647 = vmatprep.mubr.bf16.mxu0 0
      %1648 = vmatmul.mubr.bf16.gmra.mrb[0].mxu0 %v1495
      %v1649 = vpop.f32.mrb[0].mxu0
      %v1650 = vadd.f32 %v1517, %v1649
      %v1651 = vpop.f32.mrb[0].mxu0
      %v1652 = vpop.f32.mrb[0].mxu0
      %v1653 = vadd.f32 %v1517, %v1652
      %v1654 = vpop.f32.mrb[0].mxu0
      %1655 = vmatprep.mubr.bf16.mxu0 0
      %1656 = vmatmul.mubr.bf16.gmra.mrb[0].mxu0 %v1496
      %v1657 = vpop.f32.mrb[0].mxu0
      %v1658 = vadd.f32 %v1517, %v1657
      %v1659 = vpop.f32.mrb[0].mxu0
      %v1660 = vpop.f32.mrb[0].mxu0
      %v1661 = vadd.f32 %v1517, %v1660
      %v1662 = vpop.f32.mrb[0].mxu0
      %1663 = vdwg.mxu0
      %1664 = vst [vmem:[%s280] sm:$0xff] %v1602
      %1665 = vst [vmem:[%s280 + $0x8] sm:$0xff] %v1605
      %1666 = vst [vmem:[%s280 + $0x10] sm:$0xff] %v1610
      %1667 = vst [vmem:[%s280 + $0x18] sm:$0xff] %v1613
      %1668 = vst [vmem:[%s280 + $0x20] sm:$0xff] %v1618
      %1669 = vst [vmem:[%s280 + $0x28] sm:$0xff] %v1621
      %1670 = vst [vmem:[%s280 + $0x30] sm:$0xff] %v1626
      %1671 = vst [vmem:[%s280 + $0x38] sm:$0xff] %v1629
      %1672 = vst [vmem:[%s280 + $0x40] sm:$0xff] %v1634
      %1673 = vst [vmem:[%s280 + $0x48] sm:$0xff] %v1637
      %1674 = vst [vmem:[%s280 + $0x50] sm:$0xff] %v1642
      %1675 = vst [vmem:[%s280 + $0x58] sm:$0xff] %v1645
      %1676 = vst [vmem:[%s280 + $0x60] sm:$0xff] %v1650
      %1677 = vst [vmem:[%s280 + $0x68] sm:$0xff] %v1653
      %1678 = vst [vmem:[%s280 + $0x70] sm:$0xff] %v1658
      %1679 = vst [vmem:[%s280 + $0x78] sm:$0xff] %v1661
      %s1680 = smul.u32 16, %s18
      %p1681 = scmp.lt.s32.totalorder %s1680, 31
      %s1682 = scalar_select %p1681, %s1680, 31
      %s1683 = smul.addr %s1682, 8
      %s1684 = scalar_lea.vmem %s7, %s1683
      // Predicated region
      $region49: #{mlp_forward.1} parent=47 // pred_check
        %p1685 = pneg %p188
      $region50: #{mlp_forward.1} parent=47 // pred_check_branch
        %1687 = sbr.rel (%p1685) target = $region52
      $region51: #{mlp_forward.1} parent=47 // pred_region
        %s1688 = smul.u32 16, %s18
      $region52: #{mlp_forward.1} parent=47 // pred_fallthru
        _
    $region48: #{mlp_forward.1} parent=5 // pred_fallthru
      _
    %p1689 = scmp.le.s32.totalorder 2, %s13
    // Predicated region
    $region53: #{mlp_forward.1} parent=5 // pred_check
      %p1690 = pneg %p1689
    $region54: #{mlp_forward.1} parent=5 // pred_check_branch
      %1692 = sbr.rel (%p1690) target = $region56
    $region55: #{mlp_forward.1} parent=5 // pred_region
      %s1693 = ssub.s32 %s13, 2
      // Predicated region
      $region57: #{mlp_forward.1} parent=55 // pred_check
        %p1694 = pneg %p194
      $region58: #{mlp_forward.1} parent=55 // pred_check_branch
        %1696 = sbr.rel (%p1694) target = $region60
      $region59: #{mlp_forward.1} parent=55 // pred_region
        %s1697 = smul.u32 16, %s19
        %p1698 = scmp.lt.s32.totalorder %s1697, 31
        %s1699 = scalar_select %p1698, %s1697, 31
        %s1700 = smul.addr %s1699, 8
        %s1701 = scalar_lea.vmem %s7, %s1700
      $region60: #{mlp_forward.1} parent=55 // pred_fallthru
        _
    $region56: #{mlp_forward.1} parent=5 // pred_fallthru
      _
  $region6: #{mlp_forward.1} parent=0 // loop_footer
    %s17 = sadd.s32 1, %s13
  $region7: #{mlp_forward.1} parent=0 // loop_footer_branch
    %12 = sbr.rel target = $region3
  $region8: #{mlp_forward.1} parent=0 // loop_exit
    _

</llo_original>
